<compile_context>
chip_gen: v5e
topology: v5e:2x2
jax: 0.10.0
libtpu: 0.0.40
codegen_flags: <defaults>
</compile_context>

<pallas_src>
import functools

import jax
import jax.numpy as jnp
from jax import lax
from jax.experimental import pallas as pl
from jax.experimental.pallas import tpu as pltpu


def _soft_prompt_kernel(tok_ref, prompts_hbm, wte_hbm, out_ref, buf, sems,
                        *, s_block, prompt_len, s_pad):
    """Produce s_block output rows per grid step with a manual double buffer.

    tok_ref     : SMEM int32 [B * s_pad]   (scalar-prefetched, clamped token ids)
    prompts_hbm : HBM  [P, H]              (learned prompt rows, raw ref)
    wte_hbm     : HBM  [V, H]              (embedding table, raw ref)
    out_ref     : VMEM [s_block, H]        (output tile for (b, j))
    buf         : VMEM [2, s_block, H]     (double-buffered gather scratch)
    sems        : DMA semaphores [2, s_block]
    """
    b = pl.program_id(0)
    j = pl.program_id(1)
    num_j = pl.num_programs(1)

    def start_fetch(blk, slot):
        base = b * s_pad + blk * s_block
        for r in range(s_block):                 # static unroll: s_block DMAs in flight
            row = blk * s_block + r              # traced global sequence position
            dst = buf.at[slot, pl.ds(r, 1)]
            sem = sems.at[slot, r]

            @pl.when(row < prompt_len)           # prompt region: row from prompts table
            def _():
                pltpu.make_async_copy(
                    prompts_hbm.at[pl.ds(row, 1)], dst, sem).start()

            @pl.when(row >= prompt_len)          # real tokens: row gather from wte
            def _():
                idx = tok_ref[base + r]
                pltpu.make_async_copy(
                    wte_hbm.at[pl.ds(idx, 1)], dst, sem).start()

    slot = lax.rem(j, 2)

    # Prime the pipeline at the first block of every batch row (megacore-safe).
    @pl.when(j == 0)
    def _():
        start_fetch(j, slot)                     # j == 0, slot == 0 here

    # Prefetch the next block of this batch row into the other slot while the
    # current block's DMAs complete / the previous output tile drains.
    @pl.when(j + 1 < num_j)
    def _():
        start_fetch(j + 1, 1 - slot)

    # Wait for the current block's rows (exactly one DMA was started per row;
    # both sources have identical (1, H) shape, so the dummy descriptor matches).
    for r in range(s_block):
        pltpu.make_async_copy(
            wte_hbm.at[pl.ds(0, 1)],
            buf.at[slot, pl.ds(r, 1)],
            sems.at[slot, r],
        ).wait()

    # One lane/sublane-dense (s_block, H) store; Pallas pipelines the writeback.
    out_ref[...] = buf[slot]


def soft_prompt_forward(tokens, wte_weight, prompts, prompt_length, *, s_block=None):
    """Pallas implementation of SoftPrompt.forward."""
    B, S = tokens.shape
    V, H = wte_weight.shape
    P = int(prompt_length)
    assert 1 <= P <= S, "need prompt_length in [1, seq_len]"
    assert prompts.shape == (P, H)
    dtype = wte_weight.dtype

    if s_block is None:
        # f32 wants >=8 sublanes per output tile; sub-32-bit dtypes want >=16.
        s_block = 8 if jnp.dtype(dtype).itemsize >= 4 else 16

    num_j = pl.cdiv(S, s_block)
    S_pad = num_j * s_block

    # Clamp ids so every DMA index is a valid vocab row (also covers padding).
    tok = jnp.clip(tokens.astype(jnp.int32), 0, V - 1)
    if S_pad != S:
        tok = jnp.pad(tok, ((0, 0), (0, S_pad - S)))
    tok_flat = tok.reshape(-1)

    prompts = prompts.astype(dtype)

    out = pl.pallas_call(
        functools.partial(_soft_prompt_kernel,
                          s_block=s_block, prompt_len=P, s_pad=S_pad),
        out_shape=jax.ShapeDtypeStruct((B, S_pad, H), dtype),
        grid_spec=pltpu.PrefetchScalarGridSpec(
            num_scalar_prefetch=1,                         # token ids -> SMEM
            grid=(B, num_j),
            in_specs=[pl.BlockSpec(memory_space=pl.ANY),   # prompts stay in HBM
                      pl.BlockSpec(memory_space=pl.ANY)],  # wte stays in HBM
            out_specs=pl.BlockSpec((pl.Squeezed(), s_block, H),
                                   lambda b, j, tok: (b, j, 0)),
            scratch_shapes=[
                pltpu.VMEM((2, s_block, H), dtype),        # double-buffered gather buf
                pltpu.SemaphoreType.DMA((2, s_block)),
            ],
        ),
        compiler_params=pltpu.CompilerParams(
            dimension_semantics=("parallel", "arbitrary")),
    )(tok_flat, prompts, wte_weight)

    if S_pad != S:
        out = out[:, :S, :]
    return out


def initialize_prompts(wte_weight, prompt_length, mode, key):
    """Mirrors SoftPrompt.initialize_embedding (deterministic, in-script)."""
    V, H = wte_weight.shape
    if mode == "fixed":
        # "madeupword0000": index 50261 broadcast over prompt slots.
        return jnp.broadcast_to(wte_weight[50261], (prompt_length, H)).copy()
    elif mode == "random":
        return jax.random.normal(key, (prompt_length, H), dtype=wte_weight.dtype)
    elif mode == "sampled":
        idx = jax.random.randint(key, (prompt_length,), 0, V)
        return wte_weight[idx, :]
    elif mode == "sequential":
        return wte_weight[:prompt_length]
    else:
        raise NotImplementedError(mode)


if __name__ == "__main__":
    # Small shapes consistent with the module.  H=128 keeps the output tile
    # lane-dense; vocab must exceed 50261 so the 'fixed' init index is valid.
    B, S, H, P = 2, 32, 128, 10
    VOCAB = 50262

    key = jax.random.PRNGKey(0)
    k_wte, k_tok, k_prompt = jax.random.split(key, 3)

    wte_weight = (0.02 * jax.random.normal(k_wte, (VOCAB, H))).astype(jnp.float32)
    tokens = jax.random.randint(k_tok, (B, S), 0, VOCAB, dtype=jnp.int32)
    prompts = initialize_prompts(wte_weight, P, mode="fixed", key=k_prompt)

    out = soft_prompt_forward(tokens, wte_weight, prompts, P)
    out = jax.block_until_ready(out)

    # Pure-JAX reference of the PyTorch forward pass.
    ref = jnp.concatenate(
        [jnp.broadcast_to(prompts[None], (B, P, H)), wte_weight[tokens[:, P:]]],
        axis=1,
    )
    assert out.shape == (B, S, H), out.shape
    assert jnp.array_equal(out, ref), "mismatch vs reference"

    print("KERNEL_OK")
</pallas_src>

<mosaic_0001>
module attributes {stable_mosaic.version = 11 : i64} {
  func.func @_soft_prompt_kernel(%arg0: i32, %arg1: i32, %arg2: memref<64xi32, #tpu.memory_space<smem>>, %arg3: memref<10x128xf32, #tpu.memory_space<any>>, %arg4: memref<50262x128xf32, #tpu.memory_space<any>>, %arg5: memref<1x8x128xf32, #tpu.memory_space<vmem>>, %arg6: memref<2x8x128xf32, #tpu.memory_space<vmem>>, %arg7: memref<2x8x!tpu.dma_semaphore, #tpu.memory_space<semaphore_mem>>) attributes {dimension_semantics = [#tpu.dimension_semantics<parallel>, #tpu.dimension_semantics<arbitrary>], iteration_bounds = array<i64: 2, 4>, scalar_prefetch = 1 : i64, scratch_operands = 2 : i64, tpu.core_type = #tpu.core_type<tc>, window_params = [{}, {}, {transform_indices = @transform_2, window_bounds = array<i64: 1, 8, 128>}]} {
    %c2_i32 = arith.constant 2 : i32
    %0 = arith.remsi %arg1, %c2_i32 : i32
    %c0_i32 = arith.constant 0 : i32
    %1 = arith.cmpi eq, %arg1, %c0_i32 : i32
    %2 = arith.extui %1 : i1 to i32
    %c0_i32_0 = arith.constant 0 : i32
    %3 = arith.cmpi ne, %2, %c0_i32_0 : i32
    scf.if %3 {
      %c32_i32 = arith.constant 32 : i32
      %54 = arith.muli %arg0, %c32_i32 : i32
      %c8_i32 = arith.constant 8 : i32
      %55 = arith.muli %arg1, %c8_i32 : i32
      %56 = arith.addi %54, %55 : i32
      %c8_i32_42 = arith.constant 8 : i32
      %57 = arith.muli %arg1, %c8_i32_42 : i32
      %c0_i32_43 = arith.constant 0 : i32
      %58 = arith.addi %57, %c0_i32_43 : i32
      %c10_i32 = arith.constant 10 : i32
      %59 = arith.cmpi slt, %58, %c10_i32 : i32
      %60 = arith.extui %59 : i1 to i32
      %c0_i32_44 = arith.constant 0 : i32
      %c0_i32_45 = arith.constant 0 : i32
      %61 = arith.cmpi ne, %60, %c0_i32_45 : i32
      scf.if %61 {
        %c0_i32_105 = arith.constant 0 : i32
        %121 = tpu.memref_slice %arg3[%58, %c0_i32_105] : memref<10x128xf32, #tpu.memory_space<any>> -> memref<1x128xf32, #tpu.memory_space<any>>
        %c0_i32_106 = arith.constant 0 : i32
        %c0_i32_107 = arith.constant 0 : i32
        %122 = tpu.memref_slice %arg6[%0, %c0_i32_106, %c0_i32_107] : memref<2x8x128xf32, #tpu.memory_space<vmem>> -> memref<1x1x128xf32, #tpu.memory_space<vmem>>
        %123 = tpu.memref_squeeze %122 : memref<1x1x128xf32, #tpu.memory_space<vmem>> -> memref<1x128xf32, #tpu.memory_space<vmem>>
        %124 = tpu.memref_slice %arg7[%0, %c0_i32_44] : memref<2x8x!tpu.dma_semaphore, #tpu.memory_space<semaphore_mem>> -> memref<1x1x!tpu.dma_semaphore, #tpu.memory_space<semaphore_mem>>
        %125 = tpu.memref_squeeze %124 : memref<1x1x!tpu.dma_semaphore, #tpu.memory_space<semaphore_mem>> -> memref<!tpu.dma_semaphore, #tpu.memory_space<semaphore_mem>>
        tpu.enqueue_dma source(%121 : memref<1x128xf32, #tpu.memory_space<any>>) target(%123 : memref<1x128xf32, #tpu.memory_space<vmem>>) target_semaphore(%125 : memref<!tpu.dma_semaphore, #tpu.memory_space<semaphore_mem>>)
      } else {
      }
      %c10_i32_46 = arith.constant 10 : i32
      %62 = arith.cmpi sge, %58, %c10_i32_46 : i32
      %63 = arith.extui %62 : i1 to i32
      %c0_i32_47 = arith.constant 0 : i32
      %c0_i32_48 = arith.constant 0 : i32
      %64 = arith.cmpi ne, %63, %c0_i32_48 : i32
      scf.if %64 {
        %c0_i32_105 = arith.constant 0 : i32
        %121 = arith.addi %56, %c0_i32_105 : i32
        %122 = arith.index_cast %121 : i32 to index
        %123 = memref.load %arg2[%122] : memref<64xi32, #tpu.memory_space<smem>>
        %c0_i32_106 = arith.constant 0 : i32
        %124 = tpu.memref_slice %arg4[%123, %c0_i32_106] : memref<50262x128xf32, #tpu.memory_space<any>> -> memref<1x128xf32, #tpu.memory_space<any>>
        %c0_i32_107 = arith.constant 0 : i32
        %c0_i32_108 = arith.constant 0 : i32
        %125 = tpu.memref_slice %arg6[%0, %c0_i32_107, %c0_i32_108] : memref<2x8x128xf32, #tpu.memory_space<vmem>> -> memref<1x1x128xf32, #tpu.memory_space<vmem>>
        %126 = tpu.memref_squeeze %125 : memref<1x1x128xf32, #tpu.memory_space<vmem>> -> memref<1x128xf32, #tpu.memory_space<vmem>>
        %127 = tpu.memref_slice %arg7[%0, %c0_i32_47] : memref<2x8x!tpu.dma_semaphore, #tpu.memory_space<semaphore_mem>> -> memref<1x1x!tpu.dma_semaphore, #tpu.memory_space<semaphore_mem>>
        %128 = tpu.memref_squeeze %127 : memref<1x1x!tpu.dma_semaphore, #tpu.memory_space<semaphore_mem>> -> memref<!tpu.dma_semaphore, #tpu.memory_space<semaphore_mem>>
        tpu.enqueue_dma source(%124 : memref<1x128xf32, #tpu.memory_space<any>>) target(%126 : memref<1x128xf32, #tpu.memory_space<vmem>>) target_semaphore(%128 : memref<!tpu.dma_semaphore, #tpu.memory_space<semaphore_mem>>)
      } else {
      }
      %c8_i32_49 = arith.constant 8 : i32
      %65 = arith.muli %arg1, %c8_i32_49 : i32
      %c1_i32_50 = arith.constant 1 : i32
      %66 = arith.addi %65, %c1_i32_50 : i32
      %c10_i32_51 = arith.constant 10 : i32
      %67 = arith.cmpi slt, %66, %c10_i32_51 : i32
      %68 = arith.extui %67 : i1 to i32
      %c1_i32_52 = arith.constant 1 : i32
      %c0_i32_53 = arith.constant 0 : i32
      %69 = arith.cmpi ne, %68, %c0_i32_53 : i32
      scf.if %69 {
        %c0_i32_105 = arith.constant 0 : i32
        %121 = tpu.memref_slice %arg3[%66, %c0_i32_105] : memref<10x128xf32, #tpu.memory_space<any>> -> memref<1x128xf32, #tpu.memory_space<any>>
        %c1_i32_106 = arith.constant 1 : i32
        %c0_i32_107 = arith.constant 0 : i32
        %122 = tpu.memref_slice %arg6[%0, %c1_i32_106, %c0_i32_107] : memref<2x8x128xf32, #tpu.memory_space<vmem>> -> memref<1x1x128xf32, #tpu.memory_space<vmem>>
        %123 = tpu.memref_squeeze %122 : memref<1x1x128xf32, #tpu.memory_space<vmem>> -> memref<1x128xf32, #tpu.memory_space<vmem>>
        %124 = tpu.memref_slice %arg7[%0, %c1_i32_52] : memref<2x8x!tpu.dma_semaphore, #tpu.memory_space<semaphore_mem>> -> memref<1x1x!tpu.dma_semaphore, #tpu.memory_space<semaphore_mem>>
        %125 = tpu.memref_squeeze %124 : memref<1x1x!tpu.dma_semaphore, #tpu.memory_space<semaphore_mem>> -> memref<!tpu.dma_semaphore, #tpu.memory_space<semaphore_mem>>
        tpu.enqueue_dma source(%121 : memref<1x128xf32, #tpu.memory_space<any>>) target(%123 : memref<1x128xf32, #tpu.memory_space<vmem>>) target_semaphore(%125 : memref<!tpu.dma_semaphore, #tpu.memory_space<semaphore_mem>>)
      } else {
      }
      %c10_i32_54 = arith.constant 10 : i32
      %70 = arith.cmpi sge, %66, %c10_i32_54 : i32
      %71 = arith.extui %70 : i1 to i32
      %c1_i32_55 = arith.constant 1 : i32
      %c0_i32_56 = arith.constant 0 : i32
      %72 = arith.cmpi ne, %71, %c0_i32_56 : i32
      scf.if %72 {
        %c1_i32_105 = arith.constant 1 : i32
        %121 = arith.addi %56, %c1_i32_105 : i32
        %122 = arith.index_cast %121 : i32 to index
        %123 = memref.load %arg2[%122] : memref<64xi32, #tpu.memory_space<smem>>
        %c0_i32_106 = arith.constant 0 : i32
        %124 = tpu.memref_slice %arg4[%123, %c0_i32_106] : memref<50262x128xf32, #tpu.memory_space<any>> -> memref<1x128xf32, #tpu.memory_space<any>>
        %c1_i32_107 = arith.constant 1 : i32
        %c0_i32_108 = arith.constant 0 : i32
        %125 = tpu.memref_slice %arg6[%0, %c1_i32_107, %c0_i32_108] : memref<2x8x128xf32, #tpu.memory_space<vmem>> -> memref<1x1x128xf32, #tpu.memory_space<vmem>>
        %126 = tpu.memref_squeeze %125 : memref<1x1x128xf32, #tpu.memory_space<vmem>> -> memref<1x128xf32, #tpu.memory_space<vmem>>
        %127 = tpu.memref_slice %arg7[%0, %c1_i32_55] : memref<2x8x!tpu.dma_semaphore, #tpu.memory_space<semaphore_mem>> -> memref<1x1x!tpu.dma_semaphore, #tpu.memory_space<semaphore_mem>>
        %128 = tpu.memref_squeeze %127 : memref<1x1x!tpu.dma_semaphore, #tpu.memory_space<semaphore_mem>> -> memref<!tpu.dma_semaphore, #tpu.memory_space<semaphore_mem>>
        tpu.enqueue_dma source(%124 : memref<1x128xf32, #tpu.memory_space<any>>) target(%126 : memref<1x128xf32, #tpu.memory_space<vmem>>) target_semaphore(%128 : memref<!tpu.dma_semaphore, #tpu.memory_space<semaphore_mem>>)
      } else {
      }
      %c8_i32_57 = arith.constant 8 : i32
      %73 = arith.muli %arg1, %c8_i32_57 : i32
      %c2_i32_58 = arith.constant 2 : i32
      %74 = arith.addi %73, %c2_i32_58 : i32
      %c10_i32_59 = arith.constant 10 : i32
      %75 = arith.cmpi slt, %74, %c10_i32_59 : i32
      %76 = arith.extui %75 : i1 to i32
      %c2_i32_60 = arith.constant 2 : i32
      %c0_i32_61 = arith.constant 0 : i32
      %77 = arith.cmpi ne, %76, %c0_i32_61 : i32
      scf.if %77 {
        %c0_i32_105 = arith.constant 0 : i32
        %121 = tpu.memref_slice %arg3[%74, %c0_i32_105] : memref<10x128xf32, #tpu.memory_space<any>> -> memref<1x128xf32, #tpu.memory_space<any>>
        %c2_i32_106 = arith.constant 2 : i32
        %c0_i32_107 = arith.constant 0 : i32
        %122 = tpu.memref_slice %arg6[%0, %c2_i32_106, %c0_i32_107] : memref<2x8x128xf32, #tpu.memory_space<vmem>> -> memref<1x1x128xf32, #tpu.memory_space<vmem>>
        %123 = tpu.memref_squeeze %122 : memref<1x1x128xf32, #tpu.memory_space<vmem>> -> memref<1x128xf32, #tpu.memory_space<vmem>>
        %124 = tpu.memref_slice %arg7[%0, %c2_i32_60] : memref<2x8x!tpu.dma_semaphore, #tpu.memory_space<semaphore_mem>> -> memref<1x1x!tpu.dma_semaphore, #tpu.memory_space<semaphore_mem>>
        %125 = tpu.memref_squeeze %124 : memref<1x1x!tpu.dma_semaphore, #tpu.memory_space<semaphore_mem>> -> memref<!tpu.dma_semaphore, #tpu.memory_space<semaphore_mem>>
        tpu.enqueue_dma source(%121 : memref<1x128xf32, #tpu.memory_space<any>>) target(%123 : memref<1x128xf32, #tpu.memory_space<vmem>>) target_semaphore(%125 : memref<!tpu.dma_semaphore, #tpu.memory_space<semaphore_mem>>)
      } else {
      }
      %c10_i32_62 = arith.constant 10 : i32
      %78 = arith.cmpi sge, %74, %c10_i32_62 : i32
      %79 = arith.extui %78 : i1 to i32
      %c2_i32_63 = arith.constant 2 : i32
      %c0_i32_64 = arith.constant 0 : i32
      %80 = arith.cmpi ne, %79, %c0_i32_64 : i32
      scf.if %80 {
        %c2_i32_105 = arith.constant 2 : i32
        %121 = arith.addi %56, %c2_i32_105 : i32
        %122 = arith.index_cast %121 : i32 to index
        %123 = memref.load %arg2[%122] : memref<64xi32, #tpu.memory_space<smem>>
        %c0_i32_106 = arith.constant 0 : i32
        %124 = tpu.memref_slice %arg4[%123, %c0_i32_106] : memref<50262x128xf32, #tpu.memory_space<any>> -> memref<1x128xf32, #tpu.memory_space<any>>
        %c2_i32_107 = arith.constant 2 : i32
        %c0_i32_108 = arith.constant 0 : i32
        %125 = tpu.memref_slice %arg6[%0, %c2_i32_107, %c0_i32_108] : memref<2x8x128xf32, #tpu.memory_space<vmem>> -> memref<1x1x128xf32, #tpu.memory_space<vmem>>
        %126 = tpu.memref_squeeze %125 : memref<1x1x128xf32, #tpu.memory_space<vmem>> -> memref<1x128xf32, #tpu.memory_space<vmem>>
        %127 = tpu.memref_slice %arg7[%0, %c2_i32_63] : memref<2x8x!tpu.dma_semaphore, #tpu.memory_space<semaphore_mem>> -> memref<1x1x!tpu.dma_semaphore, #tpu.memory_space<semaphore_mem>>
        %128 = tpu.memref_squeeze %127 : memref<1x1x!tpu.dma_semaphore, #tpu.memory_space<semaphore_mem>> -> memref<!tpu.dma_semaphore, #tpu.memory_space<semaphore_mem>>
        tpu.enqueue_dma source(%124 : memref<1x128xf32, #tpu.memory_space<any>>) target(%126 : memref<1x128xf32, #tpu.memory_space<vmem>>) target_semaphore(%128 : memref<!tpu.dma_semaphore, #tpu.memory_space<semaphore_mem>>)
      } else {
      }
      %c8_i32_65 = arith.constant 8 : i32
      %81 = arith.muli %arg1, %c8_i32_65 : i32
      %c3_i32_66 = arith.constant 3 : i32
      %82 = arith.addi %81, %c3_i32_66 : i32
      %c10_i32_67 = arith.constant 10 : i32
      %83 = arith.cmpi slt, %82, %c10_i32_67 : i32
      %84 = arith.extui %83 : i1 to i32
      %c3_i32_68 = arith.constant 3 : i32
      %c0_i32_69 = arith.constant 0 : i32
      %85 = arith.cmpi ne, %84, %c0_i32_69 : i32
      scf.if %85 {
        %c0_i32_105 = arith.constant 0 : i32
        %121 = tpu.memref_slice %arg3[%82, %c0_i32_105] : memref<10x128xf32, #tpu.memory_space<any>> -> memref<1x128xf32, #tpu.memory_space<any>>
        %c3_i32_106 = arith.constant 3 : i32
        %c0_i32_107 = arith.constant 0 : i32
        %122 = tpu.memref_slice %arg6[%0, %c3_i32_106, %c0_i32_107] : memref<2x8x128xf32, #tpu.memory_space<vmem>> -> memref<1x1x128xf32, #tpu.memory_space<vmem>>
        %123 = tpu.memref_squeeze %122 : memref<1x1x128xf32, #tpu.memory_space<vmem>> -> memref<1x128xf32, #tpu.memory_space<vmem>>
        %124 = tpu.memref_slice %arg7[%0, %c3_i32_68] : memref<2x8x!tpu.dma_semaphore, #tpu.memory_space<semaphore_mem>> -> memref<1x1x!tpu.dma_semaphore, #tpu.memory_space<semaphore_mem>>
        %125 = tpu.memref_squeeze %124 : memref<1x1x!tpu.dma_semaphore, #tpu.memory_space<semaphore_mem>> -> memref<!tpu.dma_semaphore, #tpu.memory_space<semaphore_mem>>
        tpu.enqueue_dma source(%121 : memref<1x128xf32, #tpu.memory_space<any>>) target(%123 : memref<1x128xf32, #tpu.memory_space<vmem>>) target_semaphore(%125 : memref<!tpu.dma_semaphore, #tpu.memory_space<semaphore_mem>>)
      } else {
      }
      %c10_i32_70 = arith.constant 10 : i32
      %86 = arith.cmpi sge, %82, %c10_i32_70 : i32
      %87 = arith.extui %86 : i1 to i32
      %c3_i32_71 = arith.constant 3 : i32
      %c0_i32_72 = arith.constant 0 : i32
      %88 = arith.cmpi ne, %87, %c0_i32_72 : i32
      scf.if %88 {
        %c3_i32_105 = arith.constant 3 : i32
        %121 = arith.addi %56, %c3_i32_105 : i32
        %122 = arith.index_cast %121 : i32 to index
        %123 = memref.load %arg2[%122] : memref<64xi32, #tpu.memory_space<smem>>
        %c0_i32_106 = arith.constant 0 : i32
        %124 = tpu.memref_slice %arg4[%123, %c0_i32_106] : memref<50262x128xf32, #tpu.memory_space<any>> -> memref<1x128xf32, #tpu.memory_space<any>>
        %c3_i32_107 = arith.constant 3 : i32
        %c0_i32_108 = arith.constant 0 : i32
        %125 = tpu.memref_slice %arg6[%0, %c3_i32_107, %c0_i32_108] : memref<2x8x128xf32, #tpu.memory_space<vmem>> -> memref<1x1x128xf32, #tpu.memory_space<vmem>>
        %126 = tpu.memref_squeeze %125 : memref<1x1x128xf32, #tpu.memory_space<vmem>> -> memref<1x128xf32, #tpu.memory_space<vmem>>
        %127 = tpu.memref_slice %arg7[%0, %c3_i32_71] : memref<2x8x!tpu.dma_semaphore, #tpu.memory_space<semaphore_mem>> -> memref<1x1x!tpu.dma_semaphore, #tpu.memory_space<semaphore_mem>>
        %128 = tpu.memref_squeeze %127 : memref<1x1x!tpu.dma_semaphore, #tpu.memory_space<semaphore_mem>> -> memref<!tpu.dma_semaphore, #tpu.memory_space<semaphore_mem>>
        tpu.enqueue_dma source(%124 : memref<1x128xf32, #tpu.memory_space<any>>) target(%126 : memref<1x128xf32, #tpu.memory_space<vmem>>) target_semaphore(%128 : memref<!tpu.dma_semaphore, #tpu.memory_space<semaphore_mem>>)
      } else {
      }
      %c8_i32_73 = arith.constant 8 : i32
      %89 = arith.muli %arg1, %c8_i32_73 : i32
      %c4_i32_74 = arith.constant 4 : i32
      %90 = arith.addi %89, %c4_i32_74 : i32
      %c10_i32_75 = arith.constant 10 : i32
      %91 = arith.cmpi slt, %90, %c10_i32_75 : i32
      %92 = arith.extui %91 : i1 to i32
      %c4_i32_76 = arith.constant 4 : i32
      %c0_i32_77 = arith.constant 0 : i32
      %93 = arith.cmpi ne, %92, %c0_i32_77 : i32
      scf.if %93 {
        %c0_i32_105 = arith.constant 0 : i32
        %121 = tpu.memref_slice %arg3[%90, %c0_i32_105] : memref<10x128xf32, #tpu.memory_space<any>> -> memref<1x128xf32, #tpu.memory_space<any>>
        %c4_i32_106 = arith.constant 4 : i32
        %c0_i32_107 = arith.constant 0 : i32
        %122 = tpu.memref_slice %arg6[%0, %c4_i32_106, %c0_i32_107] : memref<2x8x128xf32, #tpu.memory_space<vmem>> -> memref<1x1x128xf32, #tpu.memory_space<vmem>>
        %123 = tpu.memref_squeeze %122 : memref<1x1x128xf32, #tpu.memory_space<vmem>> -> memref<1x128xf32, #tpu.memory_space<vmem>>
        %124 = tpu.memref_slice %arg7[%0, %c4_i32_76] : memref<2x8x!tpu.dma_semaphore, #tpu.memory_space<semaphore_mem>> -> memref<1x1x!tpu.dma_semaphore, #tpu.memory_space<semaphore_mem>>
        %125 = tpu.memref_squeeze %124 : memref<1x1x!tpu.dma_semaphore, #tpu.memory_space<semaphore_mem>> -> memref<!tpu.dma_semaphore, #tpu.memory_space<semaphore_mem>>
        tpu.enqueue_dma source(%121 : memref<1x128xf32, #tpu.memory_space<any>>) target(%123 : memref<1x128xf32, #tpu.memory_space<vmem>>) target_semaphore(%125 : memref<!tpu.dma_semaphore, #tpu.memory_space<semaphore_mem>>)
      } else {
      }
      %c10_i32_78 = arith.constant 10 : i32
      %94 = arith.cmpi sge, %90, %c10_i32_78 : i32
      %95 = arith.extui %94 : i1 to i32
      %c4_i32_79 = arith.constant 4 : i32
      %c0_i32_80 = arith.constant 0 : i32
      %96 = arith.cmpi ne, %95, %c0_i32_80 : i32
      scf.if %96 {
        %c4_i32_105 = arith.constant 4 : i32
        %121 = arith.addi %56, %c4_i32_105 : i32
        %122 = arith.index_cast %121 : i32 to index
        %123 = memref.load %arg2[%122] : memref<64xi32, #tpu.memory_space<smem>>
        %c0_i32_106 = arith.constant 0 : i32
        %124 = tpu.memref_slice %arg4[%123, %c0_i32_106] : memref<50262x128xf32, #tpu.memory_space<any>> -> memref<1x128xf32, #tpu.memory_space<any>>
        %c4_i32_107 = arith.constant 4 : i32
        %c0_i32_108 = arith.constant 0 : i32
        %125 = tpu.memref_slice %arg6[%0, %c4_i32_107, %c0_i32_108] : memref<2x8x128xf32, #tpu.memory_space<vmem>> -> memref<1x1x128xf32, #tpu.memory_space<vmem>>
        %126 = tpu.memref_squeeze %125 : memref<1x1x128xf32, #tpu.memory_space<vmem>> -> memref<1x128xf32, #tpu.memory_space<vmem>>
        %127 = tpu.memref_slice %arg7[%0, %c4_i32_79] : memref<2x8x!tpu.dma_semaphore, #tpu.memory_space<semaphore_mem>> -> memref<1x1x!tpu.dma_semaphore, #tpu.memory_space<semaphore_mem>>
        %128 = tpu.memref_squeeze %127 : memref<1x1x!tpu.dma_semaphore, #tpu.memory_space<semaphore_mem>> -> memref<!tpu.dma_semaphore, #tpu.memory_space<semaphore_mem>>
        tpu.enqueue_dma source(%124 : memref<1x128xf32, #tpu.memory_space<any>>) target(%126 : memref<1x128xf32, #tpu.memory_space<vmem>>) target_semaphore(%128 : memref<!tpu.dma_semaphore, #tpu.memory_space<semaphore_mem>>)
      } else {
      }
      %c8_i32_81 = arith.constant 8 : i32
      %97 = arith.muli %arg1, %c8_i32_81 : i32
      %c5_i32_82 = arith.constant 5 : i32
      %98 = arith.addi %97, %c5_i32_82 : i32
      %c10_i32_83 = arith.constant 10 : i32
      %99 = arith.cmpi slt, %98, %c10_i32_83 : i32
      %100 = arith.extui %99 : i1 to i32
      %c5_i32_84 = arith.constant 5 : i32
      %c0_i32_85 = arith.constant 0 : i32
      %101 = arith.cmpi ne, %100, %c0_i32_85 : i32
      scf.if %101 {
        %c0_i32_105 = arith.constant 0 : i32
        %121 = tpu.memref_slice %arg3[%98, %c0_i32_105] : memref<10x128xf32, #tpu.memory_space<any>> -> memref<1x128xf32, #tpu.memory_space<any>>
        %c5_i32_106 = arith.constant 5 : i32
        %c0_i32_107 = arith.constant 0 : i32
        %122 = tpu.memref_slice %arg6[%0, %c5_i32_106, %c0_i32_107] : memref<2x8x128xf32, #tpu.memory_space<vmem>> -> memref<1x1x128xf32, #tpu.memory_space<vmem>>
        %123 = tpu.memref_squeeze %122 : memref<1x1x128xf32, #tpu.memory_space<vmem>> -> memref<1x128xf32, #tpu.memory_space<vmem>>
        %124 = tpu.memref_slice %arg7[%0, %c5_i32_84] : memref<2x8x!tpu.dma_semaphore, #tpu.memory_space<semaphore_mem>> -> memref<1x1x!tpu.dma_semaphore, #tpu.memory_space<semaphore_mem>>
        %125 = tpu.memref_squeeze %124 : memref<1x1x!tpu.dma_semaphore, #tpu.memory_space<semaphore_mem>> -> memref<!tpu.dma_semaphore, #tpu.memory_space<semaphore_mem>>
        tpu.enqueue_dma source(%121 : memref<1x128xf32, #tpu.memory_space<any>>) target(%123 : memref<1x128xf32, #tpu.memory_space<vmem>>) target_semaphore(%125 : memref<!tpu.dma_semaphore, #tpu.memory_space<semaphore_mem>>)
      } else {
      }
      %c10_i32_86 = arith.constant 10 : i32
      %102 = arith.cmpi sge, %98, %c10_i32_86 : i32
      %103 = arith.extui %102 : i1 to i32
      %c5_i32_87 = arith.constant 5 : i32
      %c0_i32_88 = arith.constant 0 : i32
      %104 = arith.cmpi ne, %103, %c0_i32_88 : i32
      scf.if %104 {
        %c5_i32_105 = arith.constant 5 : i32
        %121 = arith.addi %56, %c5_i32_105 : i32
        %122 = arith.index_cast %121 : i32 to index
        %123 = memref.load %arg2[%122] : memref<64xi32, #tpu.memory_space<smem>>
        %c0_i32_106 = arith.constant 0 : i32
        %124 = tpu.memref_slice %arg4[%123, %c0_i32_106] : memref<50262x128xf32, #tpu.memory_space<any>> -> memref<1x128xf32, #tpu.memory_space<any>>
        %c5_i32_107 = arith.constant 5 : i32
        %c0_i32_108 = arith.constant 0 : i32
        %125 = tpu.memref_slice %arg6[%0, %c5_i32_107, %c0_i32_108] : memref<2x8x128xf32, #tpu.memory_space<vmem>> -> memref<1x1x128xf32, #tpu.memory_space<vmem>>
        %126 = tpu.memref_squeeze %125 : memref<1x1x128xf32, #tpu.memory_space<vmem>> -> memref<1x128xf32, #tpu.memory_space<vmem>>
        %127 = tpu.memref_slice %arg7[%0, %c5_i32_87] : memref<2x8x!tpu.dma_semaphore, #tpu.memory_space<semaphore_mem>> -> memref<1x1x!tpu.dma_semaphore, #tpu.memory_space<semaphore_mem>>
        %128 = tpu.memref_squeeze %127 : memref<1x1x!tpu.dma_semaphore, #tpu.memory_space<semaphore_mem>> -> memref<!tpu.dma_semaphore, #tpu.memory_space<semaphore_mem>>
        tpu.enqueue_dma source(%124 : memref<1x128xf32, #tpu.memory_space<any>>) target(%126 : memref<1x128xf32, #tpu.memory_space<vmem>>) target_semaphore(%128 : memref<!tpu.dma_semaphore, #tpu.memory_space<semaphore_mem>>)
      } else {
      }
      %c8_i32_89 = arith.constant 8 : i32
      %105 = arith.muli %arg1, %c8_i32_89 : i32
      %c6_i32_90 = arith.constant 6 : i32
      %106 = arith.addi %105, %c6_i32_90 : i32
      %c10_i32_91 = arith.constant 10 : i32
      %107 = arith.cmpi slt, %106, %c10_i32_91 : i32
      %108 = arith.extui %107 : i1 to i32
      %c6_i32_92 = arith.constant 6 : i32
      %c0_i32_93 = arith.constant 0 : i32
      %109 = arith.cmpi ne, %108, %c0_i32_93 : i32
      scf.if %109 {
        %c0_i32_105 = arith.constant 0 : i32
        %121 = tpu.memref_slice %arg3[%106, %c0_i32_105] : memref<10x128xf32, #tpu.memory_space<any>> -> memref<1x128xf32, #tpu.memory_space<any>>
        %c6_i32_106 = arith.constant 6 : i32
        %c0_i32_107 = arith.constant 0 : i32
        %122 = tpu.memref_slice %arg6[%0, %c6_i32_106, %c0_i32_107] : memref<2x8x128xf32, #tpu.memory_space<vmem>> -> memref<1x1x128xf32, #tpu.memory_space<vmem>>
        %123 = tpu.memref_squeeze %122 : memref<1x1x128xf32, #tpu.memory_space<vmem>> -> memref<1x128xf32, #tpu.memory_space<vmem>>
        %124 = tpu.memref_slice %arg7[%0, %c6_i32_92] : memref<2x8x!tpu.dma_semaphore, #tpu.memory_space<semaphore_mem>> -> memref<1x1x!tpu.dma_semaphore, #tpu.memory_space<semaphore_mem>>
        %125 = tpu.memref_squeeze %124 : memref<1x1x!tpu.dma_semaphore, #tpu.memory_space<semaphore_mem>> -> memref<!tpu.dma_semaphore, #tpu.memory_space<semaphore_mem>>
        tpu.enqueue_dma source(%121 : memref<1x128xf32, #tpu.memory_space<any>>) target(%123 : memref<1x128xf32, #tpu.memory_space<vmem>>) target_semaphore(%125 : memref<!tpu.dma_semaphore, #tpu.memory_space<semaphore_mem>>)
      } else {
      }
      %c10_i32_94 = arith.constant 10 : i32
      %110 = arith.cmpi sge, %106, %c10_i32_94 : i32
      %111 = arith.extui %110 : i1 to i32
      %c6_i32_95 = arith.constant 6 : i32
      %c0_i32_96 = arith.constant 0 : i32
      %112 = arith.cmpi ne, %111, %c0_i32_96 : i32
      scf.if %112 {
        %c6_i32_105 = arith.constant 6 : i32
        %121 = arith.addi %56, %c6_i32_105 : i32
        %122 = arith.index_cast %121 : i32 to index
        %123 = memref.load %arg2[%122] : memref<64xi32, #tpu.memory_space<smem>>
        %c0_i32_106 = arith.constant 0 : i32
        %124 = tpu.memref_slice %arg4[%123, %c0_i32_106] : memref<50262x128xf32, #tpu.memory_space<any>> -> memref<1x128xf32, #tpu.memory_space<any>>
        %c6_i32_107 = arith.constant 6 : i32
        %c0_i32_108 = arith.constant 0 : i32
        %125 = tpu.memref_slice %arg6[%0, %c6_i32_107, %c0_i32_108] : memref<2x8x128xf32, #tpu.memory_space<vmem>> -> memref<1x1x128xf32, #tpu.memory_space<vmem>>
        %126 = tpu.memref_squeeze %125 : memref<1x1x128xf32, #tpu.memory_space<vmem>> -> memref<1x128xf32, #tpu.memory_space<vmem>>
        %127 = tpu.memref_slice %arg7[%0, %c6_i32_95] : memref<2x8x!tpu.dma_semaphore, #tpu.memory_space<semaphore_mem>> -> memref<1x1x!tpu.dma_semaphore, #tpu.memory_space<semaphore_mem>>
        %128 = tpu.memref_squeeze %127 : memref<1x1x!tpu.dma_semaphore, #tpu.memory_space<semaphore_mem>> -> memref<!tpu.dma_semaphore, #tpu.memory_space<semaphore_mem>>
        tpu.enqueue_dma source(%124 : memref<1x128xf32, #tpu.memory_space<any>>) target(%126 : memref<1x128xf32, #tpu.memory_space<vmem>>) target_semaphore(%128 : memref<!tpu.dma_semaphore, #tpu.memory_space<semaphore_mem>>)
      } else {
      }
      %c8_i32_97 = arith.constant 8 : i32
      %113 = arith.muli %arg1, %c8_i32_97 : i32
      %c7_i32_98 = arith.constant 7 : i32
      %114 = arith.addi %113, %c7_i32_98 : i32
      %c10_i32_99 = arith.constant 10 : i32
      %115 = arith.cmpi slt, %114, %c10_i32_99 : i32
      %116 = arith.extui %115 : i1 to i32
      %c7_i32_100 = arith.constant 7 : i32
      %c0_i32_101 = arith.constant 0 : i32
      %117 = arith.cmpi ne, %116, %c0_i32_101 : i32
      scf.if %117 {
        %c0_i32_105 = arith.constant 0 : i32
        %121 = tpu.memref_slice %arg3[%114, %c0_i32_105] : memref<10x128xf32, #tpu.memory_space<any>> -> memref<1x128xf32, #tpu.memory_space<any>>
        %c7_i32_106 = arith.constant 7 : i32
        %c0_i32_107 = arith.constant 0 : i32
        %122 = tpu.memref_slice %arg6[%0, %c7_i32_106, %c0_i32_107] : memref<2x8x128xf32, #tpu.memory_space<vmem>> -> memref<1x1x128xf32, #tpu.memory_space<vmem>>
        %123 = tpu.memref_squeeze %122 : memref<1x1x128xf32, #tpu.memory_space<vmem>> -> memref<1x128xf32, #tpu.memory_space<vmem>>
        %124 = tpu.memref_slice %arg7[%0, %c7_i32_100] : memref<2x8x!tpu.dma_semaphore, #tpu.memory_space<semaphore_mem>> -> memref<1x1x!tpu.dma_semaphore, #tpu.memory_space<semaphore_mem>>
        %125 = tpu.memref_squeeze %124 : memref<1x1x!tpu.dma_semaphore, #tpu.memory_space<semaphore_mem>> -> memref<!tpu.dma_semaphore, #tpu.memory_space<semaphore_mem>>
        tpu.enqueue_dma source(%121 : memref<1x128xf32, #tpu.memory_space<any>>) target(%123 : memref<1x128xf32, #tpu.memory_space<vmem>>) target_semaphore(%125 : memref<!tpu.dma_semaphore, #tpu.memory_space<semaphore_mem>>)
      } else {
      }
      %c10_i32_102 = arith.constant 10 : i32
      %118 = arith.cmpi sge, %114, %c10_i32_102 : i32
      %119 = arith.extui %118 : i1 to i32
      %c7_i32_103 = arith.constant 7 : i32
      %c0_i32_104 = arith.constant 0 : i32
      %120 = arith.cmpi ne, %119, %c0_i32_104 : i32
      scf.if %120 {
        %c7_i32_105 = arith.constant 7 : i32
        %121 = arith.addi %56, %c7_i32_105 : i32
        %122 = arith.index_cast %121 : i32 to index
        %123 = memref.load %arg2[%122] : memref<64xi32, #tpu.memory_space<smem>>
        %c0_i32_106 = arith.constant 0 : i32
        %124 = tpu.memref_slice %arg4[%123, %c0_i32_106] : memref<50262x128xf32, #tpu.memory_space<any>> -> memref<1x128xf32, #tpu.memory_space<any>>
        %c7_i32_107 = arith.constant 7 : i32
        %c0_i32_108 = arith.constant 0 : i32
        %125 = tpu.memref_slice %arg6[%0, %c7_i32_107, %c0_i32_108] : memref<2x8x128xf32, #tpu.memory_space<vmem>> -> memref<1x1x128xf32, #tpu.memory_space<vmem>>
        %126 = tpu.memref_squeeze %125 : memref<1x1x128xf32, #tpu.memory_space<vmem>> -> memref<1x128xf32, #tpu.memory_space<vmem>>
        %127 = tpu.memref_slice %arg7[%0, %c7_i32_103] : memref<2x8x!tpu.dma_semaphore, #tpu.memory_space<semaphore_mem>> -> memref<1x1x!tpu.dma_semaphore, #tpu.memory_space<semaphore_mem>>
        %128 = tpu.memref_squeeze %127 : memref<1x1x!tpu.dma_semaphore, #tpu.memory_space<semaphore_mem>> -> memref<!tpu.dma_semaphore, #tpu.memory_space<semaphore_mem>>
        tpu.enqueue_dma source(%124 : memref<1x128xf32, #tpu.memory_space<any>>) target(%126 : memref<1x128xf32, #tpu.memory_space<vmem>>) target_semaphore(%128 : memref<!tpu.dma_semaphore, #tpu.memory_space<semaphore_mem>>)
      } else {
      }
    } else {
    }
    %c1_i32 = arith.constant 1 : i32
    %4 = arith.addi %arg1, %c1_i32 : i32
    %c4_i32 = arith.constant 4 : i32
    %5 = arith.cmpi slt, %4, %c4_i32 : i32
    %6 = arith.extui %5 : i1 to i32
    %c0_i32_1 = arith.constant 0 : i32
    %7 = arith.cmpi ne, %6, %c0_i32_1 : i32
    scf.if %7 {
      %c1_i32_42 = arith.constant 1 : i32
      %54 = arith.addi %arg1, %c1_i32_42 : i32
      %c1_i32_43 = arith.constant 1 : i32
      %55 = arith.subi %c1_i32_43, %0 : i32
      %c32_i32 = arith.constant 32 : i32
      %56 = arith.muli %arg0, %c32_i32 : i32
      %c8_i32 = arith.constant 8 : i32
      %57 = arith.muli %54, %c8_i32 : i32
      %58 = arith.addi %56, %57 : i32
      %c8_i32_44 = arith.constant 8 : i32
      %59 = arith.muli %54, %c8_i32_44 : i32
      %c0_i32_45 = arith.constant 0 : i32
      %60 = arith.addi %59, %c0_i32_45 : i32
      %c10_i32 = arith.constant 10 : i32
      %61 = arith.cmpi slt, %60, %c10_i32 : i32
      %62 = arith.extui %61 : i1 to i32
      %c0_i32_46 = arith.constant 0 : i32
      %c0_i32_47 = arith.constant 0 : i32
      %63 = arith.cmpi ne, %62, %c0_i32_47 : i32
      scf.if %63 {
        %c0_i32_107 = arith.constant 0 : i32
        %123 = tpu.memref_slice %arg3[%60, %c0_i32_107] : memref<10x128xf32, #tpu.memory_space<any>> -> memref<1x128xf32, #tpu.memory_space<any>>
        %c0_i32_108 = arith.constant 0 : i32
        %c0_i32_109 = arith.constant 0 : i32
        %124 = tpu.memref_slice %arg6[%55, %c0_i32_108, %c0_i32_109] : memref<2x8x128xf32, #tpu.memory_space<vmem>> -> memref<1x1x128xf32, #tpu.memory_space<vmem>>
        %125 = tpu.memref_squeeze %124 : memref<1x1x128xf32, #tpu.memory_space<vmem>> -> memref<1x128xf32, #tpu.memory_space<vmem>>
        %126 = tpu.memref_slice %arg7[%55, %c0_i32_46] : memref<2x8x!tpu.dma_semaphore, #tpu.memory_space<semaphore_mem>> -> memref<1x1x!tpu.dma_semaphore, #tpu.memory_space<semaphore_mem>>
        %127 = tpu.memref_squeeze %126 : memref<1x1x!tpu.dma_semaphore, #tpu.memory_space<semaphore_mem>> -> memref<!tpu.dma_semaphore, #tpu.memory_space<semaphore_mem>>
        tpu.enqueue_dma source(%123 : memref<1x128xf32, #tpu.memory_space<any>>) target(%125 : memref<1x128xf32, #tpu.memory_space<vmem>>) target_semaphore(%127 : memref<!tpu.dma_semaphore, #tpu.memory_space<semaphore_mem>>)
      } else {
      }
      %c10_i32_48 = arith.constant 10 : i32
      %64 = arith.cmpi sge, %60, %c10_i32_48 : i32
      %65 = arith.extui %64 : i1 to i32
      %c0_i32_49 = arith.constant 0 : i32
      %c0_i32_50 = arith.constant 0 : i32
      %66 = arith.cmpi ne, %65, %c0_i32_50 : i32
      scf.if %66 {
        %c0_i32_107 = arith.constant 0 : i32
        %123 = arith.addi %58, %c0_i32_107 : i32
        %124 = arith.index_cast %123 : i32 to index
        %125 = memref.load %arg2[%124] : memref<64xi32, #tpu.memory_space<smem>>
        %c0_i32_108 = arith.constant 0 : i32
        %126 = tpu.memref_slice %arg4[%125, %c0_i32_108] : memref<50262x128xf32, #tpu.memory_space<any>> -> memref<1x128xf32, #tpu.memory_space<any>>
        %c0_i32_109 = arith.constant 0 : i32
        %c0_i32_110 = arith.constant 0 : i32
        %127 = tpu.memref_slice %arg6[%55, %c0_i32_109, %c0_i32_110] : memref<2x8x128xf32, #tpu.memory_space<vmem>> -> memref<1x1x128xf32, #tpu.memory_space<vmem>>
        %128 = tpu.memref_squeeze %127 : memref<1x1x128xf32, #tpu.memory_space<vmem>> -> memref<1x128xf32, #tpu.memory_space<vmem>>
        %129 = tpu.memref_slice %arg7[%55, %c0_i32_49] : memref<2x8x!tpu.dma_semaphore, #tpu.memory_space<semaphore_mem>> -> memref<1x1x!tpu.dma_semaphore, #tpu.memory_space<semaphore_mem>>
        %130 = tpu.memref_squeeze %129 : memref<1x1x!tpu.dma_semaphore, #tpu.memory_space<semaphore_mem>> -> memref<!tpu.dma_semaphore, #tpu.memory_space<semaphore_mem>>
        tpu.enqueue_dma source(%126 : memref<1x128xf32, #tpu.memory_space<any>>) target(%128 : memref<1x128xf32, #tpu.memory_space<vmem>>) target_semaphore(%130 : memref<!tpu.dma_semaphore, #tpu.memory_space<semaphore_mem>>)
      } else {
      }
      %c8_i32_51 = arith.constant 8 : i32
      %67 = arith.muli %54, %c8_i32_51 : i32
      %c1_i32_52 = arith.constant 1 : i32
      %68 = arith.addi %67, %c1_i32_52 : i32
      %c10_i32_53 = arith.constant 10 : i32
      %69 = arith.cmpi slt, %68, %c10_i32_53 : i32
      %70 = arith.extui %69 : i1 to i32
      %c1_i32_54 = arith.constant 1 : i32
      %c0_i32_55 = arith.constant 0 : i32
      %71 = arith.cmpi ne, %70, %c0_i32_55 : i32
      scf.if %71 {
        %c0_i32_107 = arith.constant 0 : i32
        %123 = tpu.memref_slice %arg3[%68, %c0_i32_107] : memref<10x128xf32, #tpu.memory_space<any>> -> memref<1x128xf32, #tpu.memory_space<any>>
        %c1_i32_108 = arith.constant 1 : i32
        %c0_i32_109 = arith.constant 0 : i32
        %124 = tpu.memref_slice %arg6[%55, %c1_i32_108, %c0_i32_109] : memref<2x8x128xf32, #tpu.memory_space<vmem>> -> memref<1x1x128xf32, #tpu.memory_space<vmem>>
        %125 = tpu.memref_squeeze %124 : memref<1x1x128xf32, #tpu.memory_space<vmem>> -> memref<1x128xf32, #tpu.memory_space<vmem>>
        %126 = tpu.memref_slice %arg7[%55, %c1_i32_54] : memref<2x8x!tpu.dma_semaphore, #tpu.memory_space<semaphore_mem>> -> memref<1x1x!tpu.dma_semaphore, #tpu.memory_space<semaphore_mem>>
        %127 = tpu.memref_squeeze %126 : memref<1x1x!tpu.dma_semaphore, #tpu.memory_space<semaphore_mem>> -> memref<!tpu.dma_semaphore, #tpu.memory_space<semaphore_mem>>
        tpu.enqueue_dma source(%123 : memref<1x128xf32, #tpu.memory_space<any>>) target(%125 : memref<1x128xf32, #tpu.memory_space<vmem>>) target_semaphore(%127 : memref<!tpu.dma_semaphore, #tpu.memory_space<semaphore_mem>>)
      } else {
      }
      %c10_i32_56 = arith.constant 10 : i32
      %72 = arith.cmpi sge, %68, %c10_i32_56 : i32
      %73 = arith.extui %72 : i1 to i32
      %c1_i32_57 = arith.constant 1 : i32
      %c0_i32_58 = arith.constant 0 : i32
      %74 = arith.cmpi ne, %73, %c0_i32_58 : i32
      scf.if %74 {
        %c1_i32_107 = arith.constant 1 : i32
        %123 = arith.addi %58, %c1_i32_107 : i32
        %124 = arith.index_cast %123 : i32 to index
        %125 = memref.load %arg2[%124] : memref<64xi32, #tpu.memory_space<smem>>
        %c0_i32_108 = arith.constant 0 : i32
        %126 = tpu.memref_slice %arg4[%125, %c0_i32_108] : memref<50262x128xf32, #tpu.memory_space<any>> -> memref<1x128xf32, #tpu.memory_space<any>>
        %c1_i32_109 = arith.constant 1 : i32
        %c0_i32_110 = arith.constant 0 : i32
        %127 = tpu.memref_slice %arg6[%55, %c1_i32_109, %c0_i32_110] : memref<2x8x128xf32, #tpu.memory_space<vmem>> -> memref<1x1x128xf32, #tpu.memory_space<vmem>>
        %128 = tpu.memref_squeeze %127 : memref<1x1x128xf32, #tpu.memory_space<vmem>> -> memref<1x128xf32, #tpu.memory_space<vmem>>
        %129 = tpu.memref_slice %arg7[%55, %c1_i32_57] : memref<2x8x!tpu.dma_semaphore, #tpu.memory_space<semaphore_mem>> -> memref<1x1x!tpu.dma_semaphore, #tpu.memory_space<semaphore_mem>>
        %130 = tpu.memref_squeeze %129 : memref<1x1x!tpu.dma_semaphore, #tpu.memory_space<semaphore_mem>> -> memref<!tpu.dma_semaphore, #tpu.memory_space<semaphore_mem>>
        tpu.enqueue_dma source(%126 : memref<1x128xf32, #tpu.memory_space<any>>) target(%128 : memref<1x128xf32, #tpu.memory_space<vmem>>) target_semaphore(%130 : memref<!tpu.dma_semaphore, #tpu.memory_space<semaphore_mem>>)
      } else {
      }
      %c8_i32_59 = arith.constant 8 : i32
      %75 = arith.muli %54, %c8_i32_59 : i32
      %c2_i32_60 = arith.constant 2 : i32
      %76 = arith.addi %75, %c2_i32_60 : i32
      %c10_i32_61 = arith.constant 10 : i32
      %77 = arith.cmpi slt, %76, %c10_i32_61 : i32
      %78 = arith.extui %77 : i1 to i32
      %c2_i32_62 = arith.constant 2 : i32
      %c0_i32_63 = arith.constant 0 : i32
      %79 = arith.cmpi ne, %78, %c0_i32_63 : i32
      scf.if %79 {
        %c0_i32_107 = arith.constant 0 : i32
        %123 = tpu.memref_slice %arg3[%76, %c0_i32_107] : memref<10x128xf32, #tpu.memory_space<any>> -> memref<1x128xf32, #tpu.memory_space<any>>
        %c2_i32_108 = arith.constant 2 : i32
        %c0_i32_109 = arith.constant 0 : i32
        %124 = tpu.memref_slice %arg6[%55, %c2_i32_108, %c0_i32_109] : memref<2x8x128xf32, #tpu.memory_space<vmem>> -> memref<1x1x128xf32, #tpu.memory_space<vmem>>
        %125 = tpu.memref_squeeze %124 : memref<1x1x128xf32, #tpu.memory_space<vmem>> -> memref<1x128xf32, #tpu.memory_space<vmem>>
        %126 = tpu.memref_slice %arg7[%55, %c2_i32_62] : memref<2x8x!tpu.dma_semaphore, #tpu.memory_space<semaphore_mem>> -> memref<1x1x!tpu.dma_semaphore, #tpu.memory_space<semaphore_mem>>
        %127 = tpu.memref_squeeze %126 : memref<1x1x!tpu.dma_semaphore, #tpu.memory_space<semaphore_mem>> -> memref<!tpu.dma_semaphore, #tpu.memory_space<semaphore_mem>>
        tpu.enqueue_dma source(%123 : memref<1x128xf32, #tpu.memory_space<any>>) target(%125 : memref<1x128xf32, #tpu.memory_space<vmem>>) target_semaphore(%127 : memref<!tpu.dma_semaphore, #tpu.memory_space<semaphore_mem>>)
      } else {
      }
      %c10_i32_64 = arith.constant 10 : i32
      %80 = arith.cmpi sge, %76, %c10_i32_64 : i32
      %81 = arith.extui %80 : i1 to i32
      %c2_i32_65 = arith.constant 2 : i32
      %c0_i32_66 = arith.constant 0 : i32
      %82 = arith.cmpi ne, %81, %c0_i32_66 : i32
      scf.if %82 {
        %c2_i32_107 = arith.constant 2 : i32
        %123 = arith.addi %58, %c2_i32_107 : i32
        %124 = arith.index_cast %123 : i32 to index
        %125 = memref.load %arg2[%124] : memref<64xi32, #tpu.memory_space<smem>>
        %c0_i32_108 = arith.constant 0 : i32
        %126 = tpu.memref_slice %arg4[%125, %c0_i32_108] : memref<50262x128xf32, #tpu.memory_space<any>> -> memref<1x128xf32, #tpu.memory_space<any>>
        %c2_i32_109 = arith.constant 2 : i32
        %c0_i32_110 = arith.constant 0 : i32
        %127 = tpu.memref_slice %arg6[%55, %c2_i32_109, %c0_i32_110] : memref<2x8x128xf32, #tpu.memory_space<vmem>> -> memref<1x1x128xf32, #tpu.memory_space<vmem>>
        %128 = tpu.memref_squeeze %127 : memref<1x1x128xf32, #tpu.memory_space<vmem>> -> memref<1x128xf32, #tpu.memory_space<vmem>>
        %129 = tpu.memref_slice %arg7[%55, %c2_i32_65] : memref<2x8x!tpu.dma_semaphore, #tpu.memory_space<semaphore_mem>> -> memref<1x1x!tpu.dma_semaphore, #tpu.memory_space<semaphore_mem>>
        %130 = tpu.memref_squeeze %129 : memref<1x1x!tpu.dma_semaphore, #tpu.memory_space<semaphore_mem>> -> memref<!tpu.dma_semaphore, #tpu.memory_space<semaphore_mem>>
        tpu.enqueue_dma source(%126 : memref<1x128xf32, #tpu.memory_space<any>>) target(%128 : memref<1x128xf32, #tpu.memory_space<vmem>>) target_semaphore(%130 : memref<!tpu.dma_semaphore, #tpu.memory_space<semaphore_mem>>)
      } else {
      }
      %c8_i32_67 = arith.constant 8 : i32
      %83 = arith.muli %54, %c8_i32_67 : i32
      %c3_i32_68 = arith.constant 3 : i32
      %84 = arith.addi %83, %c3_i32_68 : i32
      %c10_i32_69 = arith.constant 10 : i32
      %85 = arith.cmpi slt, %84, %c10_i32_69 : i32
      %86 = arith.extui %85 : i1 to i32
      %c3_i32_70 = arith.constant 3 : i32
      %c0_i32_71 = arith.constant 0 : i32
      %87 = arith.cmpi ne, %86, %c0_i32_71 : i32
      scf.if %87 {
        %c0_i32_107 = arith.constant 0 : i32
        %123 = tpu.memref_slice %arg3[%84, %c0_i32_107] : memref<10x128xf32, #tpu.memory_space<any>> -> memref<1x128xf32, #tpu.memory_space<any>>
        %c3_i32_108 = arith.constant 3 : i32
        %c0_i32_109 = arith.constant 0 : i32
        %124 = tpu.memref_slice %arg6[%55, %c3_i32_108, %c0_i32_109] : memref<2x8x128xf32, #tpu.memory_space<vmem>> -> memref<1x1x128xf32, #tpu.memory_space<vmem>>
        %125 = tpu.memref_squeeze %124 : memref<1x1x128xf32, #tpu.memory_space<vmem>> -> memref<1x128xf32, #tpu.memory_space<vmem>>
        %126 = tpu.memref_slice %arg7[%55, %c3_i32_70] : memref<2x8x!tpu.dma_semaphore, #tpu.memory_space<semaphore_mem>> -> memref<1x1x!tpu.dma_semaphore, #tpu.memory_space<semaphore_mem>>
        %127 = tpu.memref_squeeze %126 : memref<1x1x!tpu.dma_semaphore, #tpu.memory_space<semaphore_mem>> -> memref<!tpu.dma_semaphore, #tpu.memory_space<semaphore_mem>>
        tpu.enqueue_dma source(%123 : memref<1x128xf32, #tpu.memory_space<any>>) target(%125 : memref<1x128xf32, #tpu.memory_space<vmem>>) target_semaphore(%127 : memref<!tpu.dma_semaphore, #tpu.memory_space<semaphore_mem>>)
      } else {
      }
      %c10_i32_72 = arith.constant 10 : i32
      %88 = arith.cmpi sge, %84, %c10_i32_72 : i32
      %89 = arith.extui %88 : i1 to i32
      %c3_i32_73 = arith.constant 3 : i32
      %c0_i32_74 = arith.constant 0 : i32
      %90 = arith.cmpi ne, %89, %c0_i32_74 : i32
      scf.if %90 {
        %c3_i32_107 = arith.constant 3 : i32
        %123 = arith.addi %58, %c3_i32_107 : i32
        %124 = arith.index_cast %123 : i32 to index
        %125 = memref.load %arg2[%124] : memref<64xi32, #tpu.memory_space<smem>>
        %c0_i32_108 = arith.constant 0 : i32
        %126 = tpu.memref_slice %arg4[%125, %c0_i32_108] : memref<50262x128xf32, #tpu.memory_space<any>> -> memref<1x128xf32, #tpu.memory_space<any>>
        %c3_i32_109 = arith.constant 3 : i32
        %c0_i32_110 = arith.constant 0 : i32
        %127 = tpu.memref_slice %arg6[%55, %c3_i32_109, %c0_i32_110] : memref<2x8x128xf32, #tpu.memory_space<vmem>> -> memref<1x1x128xf32, #tpu.memory_space<vmem>>
        %128 = tpu.memref_squeeze %127 : memref<1x1x128xf32, #tpu.memory_space<vmem>> -> memref<1x128xf32, #tpu.memory_space<vmem>>
        %129 = tpu.memref_slice %arg7[%55, %c3_i32_73] : memref<2x8x!tpu.dma_semaphore, #tpu.memory_space<semaphore_mem>> -> memref<1x1x!tpu.dma_semaphore, #tpu.memory_space<semaphore_mem>>
        %130 = tpu.memref_squeeze %129 : memref<1x1x!tpu.dma_semaphore, #tpu.memory_space<semaphore_mem>> -> memref<!tpu.dma_semaphore, #tpu.memory_space<semaphore_mem>>
        tpu.enqueue_dma source(%126 : memref<1x128xf32, #tpu.memory_space<any>>) target(%128 : memref<1x128xf32, #tpu.memory_space<vmem>>) target_semaphore(%130 : memref<!tpu.dma_semaphore, #tpu.memory_space<semaphore_mem>>)
      } else {
      }
      %c8_i32_75 = arith.constant 8 : i32
      %91 = arith.muli %54, %c8_i32_75 : i32
      %c4_i32_76 = arith.constant 4 : i32
      %92 = arith.addi %91, %c4_i32_76 : i32
      %c10_i32_77 = arith.constant 10 : i32
      %93 = arith.cmpi slt, %92, %c10_i32_77 : i32
      %94 = arith.extui %93 : i1 to i32
      %c4_i32_78 = arith.constant 4 : i32
      %c0_i32_79 = arith.constant 0 : i32
      %95 = arith.cmpi ne, %94, %c0_i32_79 : i32
      scf.if %95 {
        %c0_i32_107 = arith.constant 0 : i32
        %123 = tpu.memref_slice %arg3[%92, %c0_i32_107] : memref<10x128xf32, #tpu.memory_space<any>> -> memref<1x128xf32, #tpu.memory_space<any>>
        %c4_i32_108 = arith.constant 4 : i32
        %c0_i32_109 = arith.constant 0 : i32
        %124 = tpu.memref_slice %arg6[%55, %c4_i32_108, %c0_i32_109] : memref<2x8x128xf32, #tpu.memory_space<vmem>> -> memref<1x1x128xf32, #tpu.memory_space<vmem>>
        %125 = tpu.memref_squeeze %124 : memref<1x1x128xf32, #tpu.memory_space<vmem>> -> memref<1x128xf32, #tpu.memory_space<vmem>>
        %126 = tpu.memref_slice %arg7[%55, %c4_i32_78] : memref<2x8x!tpu.dma_semaphore, #tpu.memory_space<semaphore_mem>> -> memref<1x1x!tpu.dma_semaphore, #tpu.memory_space<semaphore_mem>>
        %127 = tpu.memref_squeeze %126 : memref<1x1x!tpu.dma_semaphore, #tpu.memory_space<semaphore_mem>> -> memref<!tpu.dma_semaphore, #tpu.memory_space<semaphore_mem>>
        tpu.enqueue_dma source(%123 : memref<1x128xf32, #tpu.memory_space<any>>) target(%125 : memref<1x128xf32, #tpu.memory_space<vmem>>) target_semaphore(%127 : memref<!tpu.dma_semaphore, #tpu.memory_space<semaphore_mem>>)
      } else {
      }
      %c10_i32_80 = arith.constant 10 : i32
      %96 = arith.cmpi sge, %92, %c10_i32_80 : i32
      %97 = arith.extui %96 : i1 to i32
      %c4_i32_81 = arith.constant 4 : i32
      %c0_i32_82 = arith.constant 0 : i32
      %98 = arith.cmpi ne, %97, %c0_i32_82 : i32
      scf.if %98 {
        %c4_i32_107 = arith.constant 4 : i32
        %123 = arith.addi %58, %c4_i32_107 : i32
        %124 = arith.index_cast %123 : i32 to index
        %125 = memref.load %arg2[%124] : memref<64xi32, #tpu.memory_space<smem>>
        %c0_i32_108 = arith.constant 0 : i32
        %126 = tpu.memref_slice %arg4[%125, %c0_i32_108] : memref<50262x128xf32, #tpu.memory_space<any>> -> memref<1x128xf32, #tpu.memory_space<any>>
        %c4_i32_109 = arith.constant 4 : i32
        %c0_i32_110 = arith.constant 0 : i32
        %127 = tpu.memref_slice %arg6[%55, %c4_i32_109, %c0_i32_110] : memref<2x8x128xf32, #tpu.memory_space<vmem>> -> memref<1x1x128xf32, #tpu.memory_space<vmem>>
        %128 = tpu.memref_squeeze %127 : memref<1x1x128xf32, #tpu.memory_space<vmem>> -> memref<1x128xf32, #tpu.memory_space<vmem>>
        %129 = tpu.memref_slice %arg7[%55, %c4_i32_81] : memref<2x8x!tpu.dma_semaphore, #tpu.memory_space<semaphore_mem>> -> memref<1x1x!tpu.dma_semaphore, #tpu.memory_space<semaphore_mem>>
        %130 = tpu.memref_squeeze %129 : memref<1x1x!tpu.dma_semaphore, #tpu.memory_space<semaphore_mem>> -> memref<!tpu.dma_semaphore, #tpu.memory_space<semaphore_mem>>
        tpu.enqueue_dma source(%126 : memref<1x128xf32, #tpu.memory_space<any>>) target(%128 : memref<1x128xf32, #tpu.memory_space<vmem>>) target_semaphore(%130 : memref<!tpu.dma_semaphore, #tpu.memory_space<semaphore_mem>>)
      } else {
      }
      %c8_i32_83 = arith.constant 8 : i32
      %99 = arith.muli %54, %c8_i32_83 : i32
      %c5_i32_84 = arith.constant 5 : i32
      %100 = arith.addi %99, %c5_i32_84 : i32
      %c10_i32_85 = arith.constant 10 : i32
      %101 = arith.cmpi slt, %100, %c10_i32_85 : i32
      %102 = arith.extui %101 : i1 to i32
      %c5_i32_86 = arith.constant 5 : i32
      %c0_i32_87 = arith.constant 0 : i32
      %103 = arith.cmpi ne, %102, %c0_i32_87 : i32
      scf.if %103 {
        %c0_i32_107 = arith.constant 0 : i32
        %123 = tpu.memref_slice %arg3[%100, %c0_i32_107] : memref<10x128xf32, #tpu.memory_space<any>> -> memref<1x128xf32, #tpu.memory_space<any>>
        %c5_i32_108 = arith.constant 5 : i32
        %c0_i32_109 = arith.constant 0 : i32
        %124 = tpu.memref_slice %arg6[%55, %c5_i32_108, %c0_i32_109] : memref<2x8x128xf32, #tpu.memory_space<vmem>> -> memref<1x1x128xf32, #tpu.memory_space<vmem>>
        %125 = tpu.memref_squeeze %124 : memref<1x1x128xf32, #tpu.memory_space<vmem>> -> memref<1x128xf32, #tpu.memory_space<vmem>>
        %126 = tpu.memref_slice %arg7[%55, %c5_i32_86] : memref<2x8x!tpu.dma_semaphore, #tpu.memory_space<semaphore_mem>> -> memref<1x1x!tpu.dma_semaphore, #tpu.memory_space<semaphore_mem>>
        %127 = tpu.memref_squeeze %126 : memref<1x1x!tpu.dma_semaphore, #tpu.memory_space<semaphore_mem>> -> memref<!tpu.dma_semaphore, #tpu.memory_space<semaphore_mem>>
        tpu.enqueue_dma source(%123 : memref<1x128xf32, #tpu.memory_space<any>>) target(%125 : memref<1x128xf32, #tpu.memory_space<vmem>>) target_semaphore(%127 : memref<!tpu.dma_semaphore, #tpu.memory_space<semaphore_mem>>)
      } else {
      }
      %c10_i32_88 = arith.constant 10 : i32
      %104 = arith.cmpi sge, %100, %c10_i32_88 : i32
      %105 = arith.extui %104 : i1 to i32
      %c5_i32_89 = arith.constant 5 : i32
      %c0_i32_90 = arith.constant 0 : i32
      %106 = arith.cmpi ne, %105, %c0_i32_90 : i32
      scf.if %106 {
        %c5_i32_107 = arith.constant 5 : i32
        %123 = arith.addi %58, %c5_i32_107 : i32
        %124 = arith.index_cast %123 : i32 to index
        %125 = memref.load %arg2[%124] : memref<64xi32, #tpu.memory_space<smem>>
        %c0_i32_108 = arith.constant 0 : i32
        %126 = tpu.memref_slice %arg4[%125, %c0_i32_108] : memref<50262x128xf32, #tpu.memory_space<any>> -> memref<1x128xf32, #tpu.memory_space<any>>
        %c5_i32_109 = arith.constant 5 : i32
        %c0_i32_110 = arith.constant 0 : i32
        %127 = tpu.memref_slice %arg6[%55, %c5_i32_109, %c0_i32_110] : memref<2x8x128xf32, #tpu.memory_space<vmem>> -> memref<1x1x128xf32, #tpu.memory_space<vmem>>
        %128 = tpu.memref_squeeze %127 : memref<1x1x128xf32, #tpu.memory_space<vmem>> -> memref<1x128xf32, #tpu.memory_space<vmem>>
        %129 = tpu.memref_slice %arg7[%55, %c5_i32_89] : memref<2x8x!tpu.dma_semaphore, #tpu.memory_space<semaphore_mem>> -> memref<1x1x!tpu.dma_semaphore, #tpu.memory_space<semaphore_mem>>
        %130 = tpu.memref_squeeze %129 : memref<1x1x!tpu.dma_semaphore, #tpu.memory_space<semaphore_mem>> -> memref<!tpu.dma_semaphore, #tpu.memory_space<semaphore_mem>>
        tpu.enqueue_dma source(%126 : memref<1x128xf32, #tpu.memory_space<any>>) target(%128 : memref<1x128xf32, #tpu.memory_space<vmem>>) target_semaphore(%130 : memref<!tpu.dma_semaphore, #tpu.memory_space<semaphore_mem>>)
      } else {
      }
      %c8_i32_91 = arith.constant 8 : i32
      %107 = arith.muli %54, %c8_i32_91 : i32
      %c6_i32_92 = arith.constant 6 : i32
      %108 = arith.addi %107, %c6_i32_92 : i32
      %c10_i32_93 = arith.constant 10 : i32
      %109 = arith.cmpi slt, %108, %c10_i32_93 : i32
      %110 = arith.extui %109 : i1 to i32
      %c6_i32_94 = arith.constant 6 : i32
      %c0_i32_95 = arith.constant 0 : i32
      %111 = arith.cmpi ne, %110, %c0_i32_95 : i32
      scf.if %111 {
        %c0_i32_107 = arith.constant 0 : i32
        %123 = tpu.memref_slice %arg3[%108, %c0_i32_107] : memref<10x128xf32, #tpu.memory_space<any>> -> memref<1x128xf32, #tpu.memory_space<any>>
        %c6_i32_108 = arith.constant 6 : i32
        %c0_i32_109 = arith.constant 0 : i32
        %124 = tpu.memref_slice %arg6[%55, %c6_i32_108, %c0_i32_109] : memref<2x8x128xf32, #tpu.memory_space<vmem>> -> memref<1x1x128xf32, #tpu.memory_space<vmem>>
        %125 = tpu.memref_squeeze %124 : memref<1x1x128xf32, #tpu.memory_space<vmem>> -> memref<1x128xf32, #tpu.memory_space<vmem>>
        %126 = tpu.memref_slice %arg7[%55, %c6_i32_94] : memref<2x8x!tpu.dma_semaphore, #tpu.memory_space<semaphore_mem>> -> memref<1x1x!tpu.dma_semaphore, #tpu.memory_space<semaphore_mem>>
        %127 = tpu.memref_squeeze %126 : memref<1x1x!tpu.dma_semaphore, #tpu.memory_space<semaphore_mem>> -> memref<!tpu.dma_semaphore, #tpu.memory_space<semaphore_mem>>
        tpu.enqueue_dma source(%123 : memref<1x128xf32, #tpu.memory_space<any>>) target(%125 : memref<1x128xf32, #tpu.memory_space<vmem>>) target_semaphore(%127 : memref<!tpu.dma_semaphore, #tpu.memory_space<semaphore_mem>>)
      } else {
      }
      %c10_i32_96 = arith.constant 10 : i32
      %112 = arith.cmpi sge, %108, %c10_i32_96 : i32
      %113 = arith.extui %112 : i1 to i32
      %c6_i32_97 = arith.constant 6 : i32
      %c0_i32_98 = arith.constant 0 : i32
      %114 = arith.cmpi ne, %113, %c0_i32_98 : i32
      scf.if %114 {
        %c6_i32_107 = arith.constant 6 : i32
        %123 = arith.addi %58, %c6_i32_107 : i32
        %124 = arith.index_cast %123 : i32 to index
        %125 = memref.load %arg2[%124] : memref<64xi32, #tpu.memory_space<smem>>
        %c0_i32_108 = arith.constant 0 : i32
        %126 = tpu.memref_slice %arg4[%125, %c0_i32_108] : memref<50262x128xf32, #tpu.memory_space<any>> -> memref<1x128xf32, #tpu.memory_space<any>>
        %c6_i32_109 = arith.constant 6 : i32
        %c0_i32_110 = arith.constant 0 : i32
        %127 = tpu.memref_slice %arg6[%55, %c6_i32_109, %c0_i32_110] : memref<2x8x128xf32, #tpu.memory_space<vmem>> -> memref<1x1x128xf32, #tpu.memory_space<vmem>>
        %128 = tpu.memref_squeeze %127 : memref<1x1x128xf32, #tpu.memory_space<vmem>> -> memref<1x128xf32, #tpu.memory_space<vmem>>
        %129 = tpu.memref_slice %arg7[%55, %c6_i32_97] : memref<2x8x!tpu.dma_semaphore, #tpu.memory_space<semaphore_mem>> -> memref<1x1x!tpu.dma_semaphore, #tpu.memory_space<semaphore_mem>>
        %130 = tpu.memref_squeeze %129 : memref<1x1x!tpu.dma_semaphore, #tpu.memory_space<semaphore_mem>> -> memref<!tpu.dma_semaphore, #tpu.memory_space<semaphore_mem>>
        tpu.enqueue_dma source(%126 : memref<1x128xf32, #tpu.memory_space<any>>) target(%128 : memref<1x128xf32, #tpu.memory_space<vmem>>) target_semaphore(%130 : memref<!tpu.dma_semaphore, #tpu.memory_space<semaphore_mem>>)
      } else {
      }
      %c8_i32_99 = arith.constant 8 : i32
      %115 = arith.muli %54, %c8_i32_99 : i32
      %c7_i32_100 = arith.constant 7 : i32
      %116 = arith.addi %115, %c7_i32_100 : i32
      %c10_i32_101 = arith.constant 10 : i32
      %117 = arith.cmpi slt, %116, %c10_i32_101 : i32
      %118 = arith.extui %117 : i1 to i32
      %c7_i32_102 = arith.constant 7 : i32
      %c0_i32_103 = arith.constant 0 : i32
      %119 = arith.cmpi ne, %118, %c0_i32_103 : i32
      scf.if %119 {
        %c0_i32_107 = arith.constant 0 : i32
        %123 = tpu.memref_slice %arg3[%116, %c0_i32_107] : memref<10x128xf32, #tpu.memory_space<any>> -> memref<1x128xf32, #tpu.memory_space<any>>
        %c7_i32_108 = arith.constant 7 : i32
        %c0_i32_109 = arith.constant 0 : i32
        %124 = tpu.memref_slice %arg6[%55, %c7_i32_108, %c0_i32_109] : memref<2x8x128xf32, #tpu.memory_space<vmem>> -> memref<1x1x128xf32, #tpu.memory_space<vmem>>
        %125 = tpu.memref_squeeze %124 : memref<1x1x128xf32, #tpu.memory_space<vmem>> -> memref<1x128xf32, #tpu.memory_space<vmem>>
        %126 = tpu.memref_slice %arg7[%55, %c7_i32_102] : memref<2x8x!tpu.dma_semaphore, #tpu.memory_space<semaphore_mem>> -> memref<1x1x!tpu.dma_semaphore, #tpu.memory_space<semaphore_mem>>
        %127 = tpu.memref_squeeze %126 : memref<1x1x!tpu.dma_semaphore, #tpu.memory_space<semaphore_mem>> -> memref<!tpu.dma_semaphore, #tpu.memory_space<semaphore_mem>>
        tpu.enqueue_dma source(%123 : memref<1x128xf32, #tpu.memory_space<any>>) target(%125 : memref<1x128xf32, #tpu.memory_space<vmem>>) target_semaphore(%127 : memref<!tpu.dma_semaphore, #tpu.memory_space<semaphore_mem>>)
      } else {
      }
      %c10_i32_104 = arith.constant 10 : i32
      %120 = arith.cmpi sge, %116, %c10_i32_104 : i32
      %121 = arith.extui %120 : i1 to i32
      %c7_i32_105 = arith.constant 7 : i32
      %c0_i32_106 = arith.constant 0 : i32
      %122 = arith.cmpi ne, %121, %c0_i32_106 : i32
      scf.if %122 {
        %c7_i32_107 = arith.constant 7 : i32
        %123 = arith.addi %58, %c7_i32_107 : i32
        %124 = arith.index_cast %123 : i32 to index
        %125 = memref.load %arg2[%124] : memref<64xi32, #tpu.memory_space<smem>>
        %c0_i32_108 = arith.constant 0 : i32
        %126 = tpu.memref_slice %arg4[%125, %c0_i32_108] : memref<50262x128xf32, #tpu.memory_space<any>> -> memref<1x128xf32, #tpu.memory_space<any>>
        %c7_i32_109 = arith.constant 7 : i32
        %c0_i32_110 = arith.constant 0 : i32
        %127 = tpu.memref_slice %arg6[%55, %c7_i32_109, %c0_i32_110] : memref<2x8x128xf32, #tpu.memory_space<vmem>> -> memref<1x1x128xf32, #tpu.memory_space<vmem>>
        %128 = tpu.memref_squeeze %127 : memref<1x1x128xf32, #tpu.memory_space<vmem>> -> memref<1x128xf32, #tpu.memory_space<vmem>>
        %129 = tpu.memref_slice %arg7[%55, %c7_i32_105] : memref<2x8x!tpu.dma_semaphore, #tpu.memory_space<semaphore_mem>> -> memref<1x1x!tpu.dma_semaphore, #tpu.memory_space<semaphore_mem>>
        %130 = tpu.memref_squeeze %129 : memref<1x1x!tpu.dma_semaphore, #tpu.memory_space<semaphore_mem>> -> memref<!tpu.dma_semaphore, #tpu.memory_space<semaphore_mem>>
        tpu.enqueue_dma source(%126 : memref<1x128xf32, #tpu.memory_space<any>>) target(%128 : memref<1x128xf32, #tpu.memory_space<vmem>>) target_semaphore(%130 : memref<!tpu.dma_semaphore, #tpu.memory_space<semaphore_mem>>)
      } else {
      }
    } else {
    }
    %c0_i32_2 = arith.constant 0 : i32
    %c0_i32_3 = arith.constant 0 : i32
    %c0_i32_4 = arith.constant 0 : i32
    %8 = tpu.memref_slice %arg4[%c0_i32_3, %c0_i32_4] : memref<50262x128xf32, #tpu.memory_space<any>> -> memref<1x128xf32, #tpu.memory_space<any>>
    %c0_i32_5 = arith.constant 0 : i32
    %c0_i32_6 = arith.constant 0 : i32
    %9 = tpu.memref_slice %arg6[%0, %c0_i32_5, %c0_i32_6] : memref<2x8x128xf32, #tpu.memory_space<vmem>> -> memref<1x1x128xf32, #tpu.memory_space<vmem>>
    %10 = tpu.memref_squeeze %9 : memref<1x1x128xf32, #tpu.memory_space<vmem>> -> memref<1x128xf32, #tpu.memory_space<vmem>>
    %11 = tpu.memref_slice %arg7[%0, %c0_i32_2] : memref<2x8x!tpu.dma_semaphore, #tpu.memory_space<semaphore_mem>> -> memref<1x1x!tpu.dma_semaphore, #tpu.memory_space<semaphore_mem>>
    %12 = tpu.memref_squeeze %11 : memref<1x1x!tpu.dma_semaphore, #tpu.memory_space<semaphore_mem>> -> memref<!tpu.dma_semaphore, #tpu.memory_space<semaphore_mem>>
    tpu.wait_dma2 semaphore(%12 : memref<!tpu.dma_semaphore, #tpu.memory_space<semaphore_mem>>) src(%8 : memref<1x128xf32, #tpu.memory_space<any>>) dst(%10 : memref<1x128xf32, #tpu.memory_space<vmem>>)
    %c1_i32_7 = arith.constant 1 : i32
    %c0_i32_8 = arith.constant 0 : i32
    %c0_i32_9 = arith.constant 0 : i32
    %13 = tpu.memref_slice %arg4[%c0_i32_8, %c0_i32_9] : memref<50262x128xf32, #tpu.memory_space<any>> -> memref<1x128xf32, #tpu.memory_space<any>>
    %c1_i32_10 = arith.constant 1 : i32
    %c0_i32_11 = arith.constant 0 : i32
    %14 = tpu.memref_slice %arg6[%0, %c1_i32_10, %c0_i32_11] : memref<2x8x128xf32, #tpu.memory_space<vmem>> -> memref<1x1x128xf32, #tpu.memory_space<vmem>>
    %15 = tpu.memref_squeeze %14 : memref<1x1x128xf32, #tpu.memory_space<vmem>> -> memref<1x128xf32, #tpu.memory_space<vmem>>
    %16 = tpu.memref_slice %arg7[%0, %c1_i32_7] : memref<2x8x!tpu.dma_semaphore, #tpu.memory_space<semaphore_mem>> -> memref<1x1x!tpu.dma_semaphore, #tpu.memory_space<semaphore_mem>>
    %17 = tpu.memref_squeeze %16 : memref<1x1x!tpu.dma_semaphore, #tpu.memory_space<semaphore_mem>> -> memref<!tpu.dma_semaphore, #tpu.memory_space<semaphore_mem>>
    tpu.wait_dma2 semaphore(%17 : memref<!tpu.dma_semaphore, #tpu.memory_space<semaphore_mem>>) src(%13 : memref<1x128xf32, #tpu.memory_space<any>>) dst(%15 : memref<1x128xf32, #tpu.memory_space<vmem>>)
    %c2_i32_12 = arith.constant 2 : i32
    %c0_i32_13 = arith.constant 0 : i32
    %c0_i32_14 = arith.constant 0 : i32
    %18 = tpu.memref_slice %arg4[%c0_i32_13, %c0_i32_14] : memref<50262x128xf32, #tpu.memory_space<any>> -> memref<1x128xf32, #tpu.memory_space<any>>
    %c2_i32_15 = arith.constant 2 : i32
    %c0_i32_16 = arith.constant 0 : i32
    %19 = tpu.memref_slice %arg6[%0, %c2_i32_15, %c0_i32_16] : memref<2x8x128xf32, #tpu.memory_space<vmem>> -> memref<1x1x128xf32, #tpu.memory_space<vmem>>
    %20 = tpu.memref_squeeze %19 : memref<1x1x128xf32, #tpu.memory_space<vmem>> -> memref<1x128xf32, #tpu.memory_space<vmem>>
    %21 = tpu.memref_slice %arg7[%0, %c2_i32_12] : memref<2x8x!tpu.dma_semaphore, #tpu.memory_space<semaphore_mem>> -> memref<1x1x!tpu.dma_semaphore, #tpu.memory_space<semaphore_mem>>
    %22 = tpu.memref_squeeze %21 : memref<1x1x!tpu.dma_semaphore, #tpu.memory_space<semaphore_mem>> -> memref<!tpu.dma_semaphore, #tpu.memory_space<semaphore_mem>>
    tpu.wait_dma2 semaphore(%22 : memref<!tpu.dma_semaphore, #tpu.memory_space<semaphore_mem>>) src(%18 : memref<1x128xf32, #tpu.memory_space<any>>) dst(%20 : memref<1x128xf32, #tpu.memory_space<vmem>>)
    %c3_i32 = arith.constant 3 : i32
    %c0_i32_17 = arith.constant 0 : i32
    %c0_i32_18 = arith.constant 0 : i32
    %23 = tpu.memref_slice %arg4[%c0_i32_17, %c0_i32_18] : memref<50262x128xf32, #tpu.memory_space<any>> -> memref<1x128xf32, #tpu.memory_space<any>>
    %c3_i32_19 = arith.constant 3 : i32
    %c0_i32_20 = arith.constant 0 : i32
    %24 = tpu.memref_slice %arg6[%0, %c3_i32_19, %c0_i32_20] : memref<2x8x128xf32, #tpu.memory_space<vmem>> -> memref<1x1x128xf32, #tpu.memory_space<vmem>>
    %25 = tpu.memref_squeeze %24 : memref<1x1x128xf32, #tpu.memory_space<vmem>> -> memref<1x128xf32, #tpu.memory_space<vmem>>
    %26 = tpu.memref_slice %arg7[%0, %c3_i32] : memref<2x8x!tpu.dma_semaphore, #tpu.memory_space<semaphore_mem>> -> memref<1x1x!tpu.dma_semaphore, #tpu.memory_space<semaphore_mem>>
    %27 = tpu.memref_squeeze %26 : memref<1x1x!tpu.dma_semaphore, #tpu.memory_space<semaphore_mem>> -> memref<!tpu.dma_semaphore, #tpu.memory_space<semaphore_mem>>
    tpu.wait_dma2 semaphore(%27 : memref<!tpu.dma_semaphore, #tpu.memory_space<semaphore_mem>>) src(%23 : memref<1x128xf32, #tpu.memory_space<any>>) dst(%25 : memref<1x128xf32, #tpu.memory_space<vmem>>)
    %c4_i32_21 = arith.constant 4 : i32
    %c0_i32_22 = arith.constant 0 : i32
    %c0_i32_23 = arith.constant 0 : i32
    %28 = tpu.memref_slice %arg4[%c0_i32_22, %c0_i32_23] : memref<50262x128xf32, #tpu.memory_space<any>> -> memref<1x128xf32, #tpu.memory_space<any>>
    %c4_i32_24 = arith.constant 4 : i32
    %c0_i32_25 = arith.constant 0 : i32
    %29 = tpu.memref_slice %arg6[%0, %c4_i32_24, %c0_i32_25] : memref<2x8x128xf32, #tpu.memory_space<vmem>> -> memref<1x1x128xf32, #tpu.memory_space<vmem>>
    %30 = tpu.memref_squeeze %29 : memref<1x1x128xf32, #tpu.memory_space<vmem>> -> memref<1x128xf32, #tpu.memory_space<vmem>>
    %31 = tpu.memref_slice %arg7[%0, %c4_i32_21] : memref<2x8x!tpu.dma_semaphore, #tpu.memory_space<semaphore_mem>> -> memref<1x1x!tpu.dma_semaphore, #tpu.memory_space<semaphore_mem>>
    %32 = tpu.memref_squeeze %31 : memref<1x1x!tpu.dma_semaphore, #tpu.memory_space<semaphore_mem>> -> memref<!tpu.dma_semaphore, #tpu.memory_space<semaphore_mem>>
    tpu.wait_dma2 semaphore(%32 : memref<!tpu.dma_semaphore, #tpu.memory_space<semaphore_mem>>) src(%28 : memref<1x128xf32, #tpu.memory_space<any>>) dst(%30 : memref<1x128xf32, #tpu.memory_space<vmem>>)
    %c5_i32 = arith.constant 5 : i32
    %c0_i32_26 = arith.constant 0 : i32
    %c0_i32_27 = arith.constant 0 : i32
    %33 = tpu.memref_slice %arg4[%c0_i32_26, %c0_i32_27] : memref<50262x128xf32, #tpu.memory_space<any>> -> memref<1x128xf32, #tpu.memory_space<any>>
    %c5_i32_28 = arith.constant 5 : i32
    %c0_i32_29 = arith.constant 0 : i32
    %34 = tpu.memref_slice %arg6[%0, %c5_i32_28, %c0_i32_29] : memref<2x8x128xf32, #tpu.memory_space<vmem>> -> memref<1x1x128xf32, #tpu.memory_space<vmem>>
    %35 = tpu.memref_squeeze %34 : memref<1x1x128xf32, #tpu.memory_space<vmem>> -> memref<1x128xf32, #tpu.memory_space<vmem>>
    %36 = tpu.memref_slice %arg7[%0, %c5_i32] : memref<2x8x!tpu.dma_semaphore, #tpu.memory_space<semaphore_mem>> -> memref<1x1x!tpu.dma_semaphore, #tpu.memory_space<semaphore_mem>>
    %37 = tpu.memref_squeeze %36 : memref<1x1x!tpu.dma_semaphore, #tpu.memory_space<semaphore_mem>> -> memref<!tpu.dma_semaphore, #tpu.memory_space<semaphore_mem>>
    tpu.wait_dma2 semaphore(%37 : memref<!tpu.dma_semaphore, #tpu.memory_space<semaphore_mem>>) src(%33 : memref<1x128xf32, #tpu.memory_space<any>>) dst(%35 : memref<1x128xf32, #tpu.memory_space<vmem>>)
    %c6_i32 = arith.constant 6 : i32
    %c0_i32_30 = arith.constant 0 : i32
    %c0_i32_31 = arith.constant 0 : i32
    %38 = tpu.memref_slice %arg4[%c0_i32_30, %c0_i32_31] : memref<50262x128xf32, #tpu.memory_space<any>> -> memref<1x128xf32, #tpu.memory_space<any>>
    %c6_i32_32 = arith.constant 6 : i32
    %c0_i32_33 = arith.constant 0 : i32
    %39 = tpu.memref_slice %arg6[%0, %c6_i32_32, %c0_i32_33] : memref<2x8x128xf32, #tpu.memory_space<vmem>> -> memref<1x1x128xf32, #tpu.memory_space<vmem>>
    %40 = tpu.memref_squeeze %39 : memref<1x1x128xf32, #tpu.memory_space<vmem>> -> memref<1x128xf32, #tpu.memory_space<vmem>>
    %41 = tpu.memref_slice %arg7[%0, %c6_i32] : memref<2x8x!tpu.dma_semaphore, #tpu.memory_space<semaphore_mem>> -> memref<1x1x!tpu.dma_semaphore, #tpu.memory_space<semaphore_mem>>
    %42 = tpu.memref_squeeze %41 : memref<1x1x!tpu.dma_semaphore, #tpu.memory_space<semaphore_mem>> -> memref<!tpu.dma_semaphore, #tpu.memory_space<semaphore_mem>>
    tpu.wait_dma2 semaphore(%42 : memref<!tpu.dma_semaphore, #tpu.memory_space<semaphore_mem>>) src(%38 : memref<1x128xf32, #tpu.memory_space<any>>) dst(%40 : memref<1x128xf32, #tpu.memory_space<vmem>>)
    %c7_i32 = arith.constant 7 : i32
    %c0_i32_34 = arith.constant 0 : i32
    %c0_i32_35 = arith.constant 0 : i32
    %43 = tpu.memref_slice %arg4[%c0_i32_34, %c0_i32_35] : memref<50262x128xf32, #tpu.memory_space<any>> -> memref<1x128xf32, #tpu.memory_space<any>>
    %c7_i32_36 = arith.constant 7 : i32
    %c0_i32_37 = arith.constant 0 : i32
    %44 = tpu.memref_slice %arg6[%0, %c7_i32_36, %c0_i32_37] : memref<2x8x128xf32, #tpu.memory_space<vmem>> -> memref<1x1x128xf32, #tpu.memory_space<vmem>>
    %45 = tpu.memref_squeeze %44 : memref<1x1x128xf32, #tpu.memory_space<vmem>> -> memref<1x128xf32, #tpu.memory_space<vmem>>
    %46 = tpu.memref_slice %arg7[%0, %c7_i32] : memref<2x8x!tpu.dma_semaphore, #tpu.memory_space<semaphore_mem>> -> memref<1x1x!tpu.dma_semaphore, #tpu.memory_space<semaphore_mem>>
    %47 = tpu.memref_squeeze %46 : memref<1x1x!tpu.dma_semaphore, #tpu.memory_space<semaphore_mem>> -> memref<!tpu.dma_semaphore, #tpu.memory_space<semaphore_mem>>
    tpu.wait_dma2 semaphore(%47 : memref<!tpu.dma_semaphore, #tpu.memory_space<semaphore_mem>>) src(%43 : memref<1x128xf32, #tpu.memory_space<any>>) dst(%45 : memref<1x128xf32, #tpu.memory_space<vmem>>)
    %48 = arith.index_cast %0 : i32 to index
    %c0 = arith.constant 0 : index
    %c0_38 = arith.constant 0 : index
    %49 = vector.load %arg6[%48, %c0, %c0_38] : memref<2x8x128xf32, #tpu.memory_space<vmem>>, vector<1x8x128xf32>
    %50 = vector.shape_cast %49 : vector<1x8x128xf32> to vector<8x128xf32>
    %c0_39 = arith.constant 0 : index
    %c0_40 = arith.constant 0 : index
    %c0_41 = arith.constant 0 : index
    %51 = vector.load %arg5[%c0_39, %c0_40, %c0_41] : memref<1x8x128xf32, #tpu.memory_space<vmem>>, vector<1x8x128xf32>
    %52 = vector.shape_cast %51 : vector<1x8x128xf32> to vector<8x128xf32>
    %53 = vector.shape_cast %50 : vector<8x128xf32> to vector<1x8x128xf32>
    tpu.vector_store %arg5[%c0_39, %c0_40, %c0_41], %53 {strides = array<i32>} : memref<1x8x128xf32, #tpu.memory_space<vmem>>, vector<1x8x128xf32>,
    return
  }
  func.func @transform_2(%arg0: i32, %arg1: i32, %arg2: memref<64xi32, #tpu.memory_space<smem>>) -> (i32, i32, i32) {
    %c0_i32 = arith.constant 0 : i32
    %c0_i32_0 = arith.constant 0 : i32
    return %arg0, %arg1, %c0_i32 : i32, i32, i32
  }
}

</mosaic_0001>

<llo_original>
// kernel: tpu_custom_call.1
$region0: #{tpu_custom_call.1}
  #allocation0 [shape = 'u32[]', space=smem, size = 0x4, offset = 0x4, fixed_abs, tag = 'smem constant byte address 0x4 - core index']
  #allocation1 [shape = 'u32[72,128]{1,0:T(1,128)}', space=vmem, size = 0x9000, scoped, tag = 'internal scratch']
  #allocation2 [shape = 'f32[2,8,128]{2,1,0:T(8,128)}', space=vmem, size = 0x2000, scoped, tag = 'scratch operand']
  #allocation3 [shape = 's32[16]{0}', space=sflag, size = 0x40, scoped, tag = 'scratch operand']
  #allocation4 [shape = 's32[1]{0}', space=sflag, size = 0x4, scoped, tag = 'scoped memory for tpu_custom_call.1']
  #allocation5 [shape = 'u8[512]{0}', space=smem, size = 0x200, scoped, tag = 'prefetched SMEM operand 0']
  #allocation8 [shape = 's32[]', space=sflag, size = 0x4, offset = 0, fixed_abs, tag = 'sflag constant byte address 0x0 - dummy sync flag']
  #allocation9 [shape = 's32[]', space=sflag, size = 0x4, offset = 0, fixed_abs, tag = 'sflag constant byte address 0x0 - dummy sync flag']
  #allocation10 [shape = 'u32[]', space=smem, size = 0x4, offset = 0x44, fixed_abs, tag = 'smem constant byte address 0x44 - assertion arg 0']
  #allocation11 [shape = 'u32[]', space=smem, size = 0x4, offset = 0x48, fixed_abs, tag = 'smem constant byte address 0x48 - assertion arg 1']
  #allocation12 [shape = 's32[]', space=sflag, size = 0x4, offset = 0, fixed_abs, tag = 'sflag constant byte address 0x0 - dummy sync flag']
  #allocation13 [shape = 's32[]', space=sflag, size = 0x4, offset = 0, fixed_abs, tag = 'sflag constant byte address 0x0 - dummy sync flag']
  #allocation14 [shape = 's32[]', space=sflag, size = 0x4, offset = 0, fixed_abs, tag = 'sflag constant byte address 0x0 - dummy sync flag']
  #allocation15 [shape = 's32[]', space=sflag, size = 0x4, offset = 0, fixed_abs, tag = 'sflag constant byte address 0x0 - dummy sync flag']
  #allocation16 [shape = 's32[]', space=sflag, size = 0x4, offset = 0, fixed_abs, tag = 'sflag constant byte address 0x0 - dummy sync flag']
  #allocation17 [shape = 's32[]', space=sflag, size = 0x4, offset = 0, fixed_abs, tag = 'sflag constant byte address 0x0 - dummy sync flag']
  #allocation18 [shape = 's32[]', space=sflag, size = 0x4, offset = 0, fixed_abs, tag = 'sflag constant byte address 0x0 - dummy sync flag']
  #allocation19 [shape = 's32[]', space=sflag, size = 0x4, offset = 0, fixed_abs, tag = 'sflag constant byte address 0x0 - dummy sync flag']
  #allocation20 [shape = 's32[]', space=sflag, size = 0x4, offset = 0, fixed_abs, tag = 'sflag constant byte address 0x0 - dummy sync flag']
  #allocation21 [shape = 's32[]', space=sflag, size = 0x4, offset = 0, fixed_abs, tag = 'sflag constant byte address 0x0 - dummy sync flag']
  #allocation22 [shape = 's32[]', space=sflag, size = 0x4, offset = 0, fixed_abs, tag = 'sflag constant byte address 0x0 - dummy sync flag']
  #allocation23 [shape = 's32[]', space=sflag, size = 0x4, offset = 0, fixed_abs, tag = 'sflag constant byte address 0x0 - dummy sync flag']
  #allocation24 [shape = 's32[]', space=sflag, size = 0x4, offset = 0, fixed_abs, tag = 'sflag constant byte address 0x0 - dummy sync flag']
  #allocation25 [shape = 's32[]', space=sflag, size = 0x4, offset = 0, fixed_abs, tag = 'sflag constant byte address 0x0 - dummy sync flag']
  #allocation26 [shape = 's32[]', space=sflag, size = 0x4, offset = 0, fixed_abs, tag = 'sflag constant byte address 0x0 - dummy sync flag']
  #allocation27 [shape = 's32[]', space=sflag, size = 0x4, offset = 0, fixed_abs, tag = 'sflag constant byte address 0x0 - dummy sync flag']
  #allocation28 [shape = 's32[]', space=sflag, size = 0x4, offset = 0, fixed_abs, tag = 'sflag constant byte address 0x0 - dummy sync flag']
  #allocation29 [shape = 's32[]', space=sflag, size = 0x4, offset = 0, fixed_abs, tag = 'sflag constant byte address 0x0 - dummy sync flag']
  #allocation30 [shape = 's32[]', space=sflag, size = 0x4, offset = 0, fixed_abs, tag = 'sflag constant byte address 0x0 - dummy sync flag']
  #allocation31 [shape = 's32[]', space=sflag, size = 0x4, offset = 0, fixed_abs, tag = 'sflag constant byte address 0x0 - dummy sync flag']
  #allocation32 [shape = 's32[]', space=sflag, size = 0x4, offset = 0, fixed_abs, tag = 'sflag constant byte address 0x0 - dummy sync flag']
  #allocation33 [shape = 's32[]', space=sflag, size = 0x4, offset = 0, fixed_abs, tag = 'sflag constant byte address 0x0 - dummy sync flag']
  #allocation34 [shape = 's32[]', space=sflag, size = 0x4, offset = 0, fixed_abs, tag = 'sflag constant byte address 0x0 - dummy sync flag']
  #allocation35 [shape = 's32[]', space=sflag, size = 0x4, offset = 0, fixed_abs, tag = 'sflag constant byte address 0x0 - dummy sync flag']
  #allocation36 [shape = 's32[]', space=sflag, size = 0x4, offset = 0, fixed_abs, tag = 'sflag constant byte address 0x0 - dummy sync flag']
  #allocation37 [shape = 's32[]', space=sflag, size = 0x4, offset = 0, fixed_abs, tag = 'sflag constant byte address 0x0 - dummy sync flag']
  #allocation38 [shape = 's32[]', space=sflag, size = 0x4, offset = 0, fixed_abs, tag = 'sflag constant byte address 0x0 - dummy sync flag']
  #allocation39 [shape = 's32[]', space=sflag, size = 0x4, offset = 0, fixed_abs, tag = 'sflag constant byte address 0x0 - dummy sync flag']
  #allocation40 [shape = 's32[]', space=sflag, size = 0x4, offset = 0, fixed_abs, tag = 'sflag constant byte address 0x0 - dummy sync flag']
  #allocation41 [shape = 's32[]', space=sflag, size = 0x4, offset = 0, fixed_abs, tag = 'sflag constant byte address 0x0 - dummy sync flag']
  #allocation42 [shape = 's32[]', space=sflag, size = 0x4, offset = 0, fixed_abs, tag = 'sflag constant byte address 0x0 - dummy sync flag']
  #allocation43 [shape = 's32[]', space=sflag, size = 0x4, offset = 0, fixed_abs, tag = 'sflag constant byte address 0x0 - dummy sync flag']
  #allocation44 [shape = 's32[]', space=sflag, size = 0x4, offset = 0, fixed_abs, tag = 'sflag constant byte address 0x0 - dummy sync flag']
  #allocation45 [shape = 's32[]', space=sflag, size = 0x4, offset = 0, fixed_abs, tag = 'sflag constant byte address 0x0 - dummy sync flag']
  #allocation46 [shape = 's32[]', space=sflag, size = 0x4, offset = 0, fixed_abs, tag = 'sflag constant byte address 0x0 - dummy sync flag']
  #allocation47 [shape = 's32[]', space=sflag, size = 0x4, offset = 0, fixed_abs, tag = 'sflag constant byte address 0x0 - dummy sync flag']
  #allocation48 [shape = 's32[]', space=sflag, size = 0x4, offset = 0, fixed_abs, tag = 'sflag constant byte address 0x0 - dummy sync flag']
  #allocation49 [shape = 's32[]', space=sflag, size = 0x4, offset = 0, fixed_abs, tag = 'sflag constant byte address 0x0 - dummy sync flag']
  #allocation50 [shape = 's32[]', space=sflag, size = 0x4, offset = 0, fixed_abs, tag = 'sflag constant byte address 0x0 - dummy sync flag']
  #allocation51 [shape = 's32[]', space=sflag, size = 0x4, offset = 0, fixed_abs, tag = 'sflag constant byte address 0x0 - dummy sync flag']
  #allocation52 [shape = 's32[]', space=sflag, size = 0x4, offset = 0, fixed_abs, tag = 'sflag constant byte address 0x0 - dummy sync flag']
  #allocation53 [shape = 's32[]', space=sflag, size = 0x4, offset = 0, fixed_abs, tag = 'sflag constant byte address 0x0 - dummy sync flag']
  #allocation54 [shape = 's32[]', space=sflag, size = 0x4, offset = 0, fixed_abs, tag = 'sflag constant byte address 0x0 - dummy sync flag']
  #allocation55 [shape = 's32[]', space=sflag, size = 0x4, offset = 0, fixed_abs, tag = 'sflag constant byte address 0x0 - dummy sync flag']
  #allocation56 [shape = 's32[]', space=sflag, size = 0x4, offset = 0, fixed_abs, tag = 'sflag constant byte address 0x0 - dummy sync flag']
  #allocation57 [shape = 's32[]', space=sflag, size = 0x4, offset = 0, fixed_abs, tag = 'sflag constant byte address 0x0 - dummy sync flag']
  #allocation58 [shape = 's32[]', space=sflag, size = 0x4, offset = 0, fixed_abs, tag = 'sflag constant byte address 0x0 - dummy sync flag']
  #allocation59 [shape = 's32[]', space=sflag, size = 0x4, offset = 0, fixed_abs, tag = 'sflag constant byte address 0x0 - dummy sync flag']
  #allocation60 [shape = 's32[]', space=sflag, size = 0x4, offset = 0, fixed_abs, tag = 'sflag constant byte address 0x0 - dummy sync flag']
  #allocation61 [shape = 's32[]', space=sflag, size = 0x4, offset = 0, fixed_abs, tag = 'sflag constant byte address 0x0 - dummy sync flag']
  #allocation62 [shape = 's32[]', space=sflag, size = 0x4, offset = 0, fixed_abs, tag = 'sflag constant byte address 0x0 - dummy sync flag']
  #allocation63 [shape = 's32[]', space=sflag, size = 0x4, offset = 0, fixed_abs, tag = 'sflag constant byte address 0x0 - dummy sync flag']
  #allocation64 [shape = 's32[]', space=sflag, size = 0x4, offset = 0, fixed_abs, tag = 'sflag constant byte address 0x0 - dummy sync flag']
  #allocation65 [shape = 's32[]', space=sflag, size = 0x4, offset = 0, fixed_abs, tag = 'sflag constant byte address 0x0 - dummy sync flag']
  #allocation66 [shape = 's32[]', space=sflag, size = 0x4, offset = 0, fixed_abs, tag = 'sflag constant byte address 0x0 - dummy sync flag']
  #allocation67 [shape = 's32[]', space=sflag, size = 0x4, offset = 0, fixed_abs, tag = 'sflag constant byte address 0x0 - dummy sync flag']
  #allocation68 [shape = 's32[]', space=sflag, size = 0x4, offset = 0, fixed_abs, tag = 'sflag constant byte address 0x0 - dummy sync flag']
  #allocation69 [shape = 's32[]', space=sflag, size = 0x4, offset = 0, fixed_abs, tag = 'sflag constant byte address 0x0 - dummy sync flag']
  #allocation70 [shape = 's32[]', space=sflag, size = 0x4, offset = 0, fixed_abs, tag = 'sflag constant byte address 0x0 - dummy sync flag']
  #allocation71 [shape = 's32[]', space=sflag, size = 0x4, offset = 0, fixed_abs, tag = 'sflag constant byte address 0x0 - dummy sync flag']
  #allocation72 [shape = 's32[]', space=sflag, size = 0x4, offset = 0, fixed_abs, tag = 'sflag constant byte address 0x0 - dummy sync flag']
  #allocation73 [shape = 's32[]', space=sflag, size = 0x4, offset = 0, fixed_abs, tag = 'sflag constant byte address 0x0 - dummy sync flag']
  %s0 = inlined_call_operand.hbm [shape: s32[64], index: 0, kind: input, shape index: {}]
  %s1 = inlined_call_operand.hbm [shape: f32[10,128], index: 1, kind: input, shape index: {}]
  %s2 = inlined_call_operand.hbm [shape: f32[50262,128], index: 2, kind: input, shape index: {}]
  %s3 = inlined_call_operand.hbm [shape: f32[2,32,128], index: 3, kind: output, shape index: {}]
  %s4 = sld [smem:[#allocation0]]
  $region289: #{tpu_custom_call.1} parent=0
    _
  %s6 = ssub.s32 1, %s4
  %s7 = scalar_select 0, %s6, %s4
  %s9 = sshll.u32 %s0, 4
  %s10 = int_to_ptr.hbm [resolvable:$true] %s9
  %12 = dma.hbm_to_smem %s10, 16, [#allocation5], [#allocation4]
  %14 = dma.done [#allocation4], 16
  %15 = sfence
  $region1: #{tpu_custom_call.1} parent=0
    #allocation6 [shape = 'u8[8192]{0}', space=vmem, size = 0x2000, scoped, tag = 'output window, operand 0']
    #allocation7 [shape = 's32[2]{0}', space=sflag, size = 0x8, scoped, tag = 'scoped memory for tpu_custom_call.1']
    %16 = vsyncpa [#allocation7], 0
    %s17 = scalar_lea.sflag [#allocation7], 1
    %18 = vsyncpa %s17, 0
    loop: start=0, step=1, limit=9
    $region2: #{tpu_custom_call.1} parent=1 // loop_pre_header
      _
    $region3: #{tpu_custom_call.1} parent=1 // loop_header
      %s20 = sphi 0, %s24
      %p21 = scmp.ge.s32.totalorder %s20, 9
      %s26 = sphi 0, %s36
      %s27 = sphi 0, %s32
      %s28 = sphi 0, %s26
      %s29 = sphi 0, %s27
      %s41 = sphi 0, %s43
      %s44 = sphi 0, %s41
      %s54 = sphi 0, %s44
    $region4: #{tpu_custom_call.1} parent=1 // loop_header_branch
      %23 = sbr.rel (%p21) target = $region8
    $region5: #{tpu_custom_call.1} parent=1 // loop_body
      %s25 = ssub.s32 %s20, 1
      %s30 = sadd.s32 1, %s27
      %p31 = scmp.ge.s32.totalorder %s30, 4
      %s32 = scalar_select %p31, 0, %s30
      %s33 = sadd.s32 1, %s26
      %s34 = scalar_select %p31, %s33, %s26
      %p35 = scmp.ge.s32.totalorder %s34, 2
      %s36 = scalar_select %p35, 0, %s34
      %s37 = ssub.s32 %s26, %s36
      %s38 = ssub.s32 %s27, %s32
      %s39 = sor.u32 %s37, %s38
      %p40 = scmp.eq.s32.totalorder %s39, 0
      %s42 = sadd.s32 %s41, 1
      %s43 = scalar_select %p40, %s41, %s42
      %p45 = pneg %p40
      %p46 = scmp.eq.s32.totalorder %s20, 7
      %p47 = por %p45, %p46
      %p48 = scmp.ne.s32.totalorder %s41, %s44
      %p49 = scmp.eq.s32.totalorder %s20, 0
      %p50 = por %p48, %p49
      %p51 = scmp.ne.s32.totalorder %s41, %s44
      %p52 = scmp.eq.s32.totalorder %s25, 7
      %p53 = por %p51, %p52
      %p55 = scmp.ne.s32.totalorder %s44, %s54
      %p56 = scmp.eq.s32.totalorder %s25, 0
      %p57 = por %p55, %p56
      %p58 = scmp.lt.s32.totalorder %s20, 8
      // Predicated region
      $region9: #{tpu_custom_call.1} parent=5 // pred_check
        %p59 = pneg %p58
      $region10: #{tpu_custom_call.1} parent=5 // pred_check_branch
        %61 = sbr.rel (%p59) target = $region12
      $region11: #{tpu_custom_call.1} parent=5 // pred_region
        %p62 = pneg %p50
        %p63 = pneg %p47
        %s64 = sand.u32 %s41, 1
        %s65 = scalar_lea.sflag [#allocation7], %s64
        %s66 = sand.u32 %s41, 1
        %s67 = smul.addr %s66, 8
        %s68 = scalar_lea.vmem [#allocation6], %s67
        %p69 = scmp.lt.s32.totalorder %s27, 0
        %s70 = ssub.s32 0, %s27
        %s71 = scalar_select %p69, %s70, %s27
        %s72 = sand.u32 %s71, 1
        %s73 = ssub.s32 0, %s72
        %s74 = scalar_select %p69, %s73, %s72
        %p75 = scmp.eq.s32.totalorder %s27, 0
        // Predicated region
        $region13: #{tpu_custom_call.1} parent=11 // pred_check
          %p76 = pneg %p75
        $region14: #{tpu_custom_call.1} parent=11 // pred_check_branch
          %78 = sbr.rel (%p76) target = $region16
        $region15: #{tpu_custom_call.1} parent=11 // pred_region
          %s79 = smul.u32 %s26, 32
          %s80 = smul.u32 %s27, 8
          %s81 = sadd.s32 %s79, %s80
          %p82 = scmp.lt.s32.totalorder %s80, 10
          // Predicated region
          $region17: #{tpu_custom_call.1} parent=15 // pred_check
            %p83 = pneg %p82
          $region18: #{tpu_custom_call.1} parent=15 // pred_check_branch
            %85 = sbr.rel (%p83) target = $region20
          $region19: #{tpu_custom_call.1} parent=15 // pred_region
            %s86 = scalar_lea.hbm %s1, %s80
            %s87 = smul.u32 %s74, 8
            %s88 = scalar_lea.vmem [#allocation2], %s87
            %s89 = scalar_lea.sflag [#allocation3], %s87
            // Predicated region
            $region21: #{tpu_custom_call.1} parent=19 // pred_check
              _
            $region22: #{tpu_custom_call.1} parent=19 // pred_check_branch
              %91 = sbr.rel target = $region24
            $region23: #{tpu_custom_call.1} parent=19 // pred_region
              %92 = sst [smem:[#allocation10]] [#allocation9]
              %93 = sst [smem:[#allocation11]] [#allocation8]
            $region24: #{tpu_custom_call.1} parent=19 // pred_fallthru
              _
            %95 = shalt.err (0)
            %s97 = sshll.u32 %s86, 4
            %s98 = int_to_ptr.hbm [resolvable:$true] %s97
            %s99 = sshll.u32 %s88, 4
            %s100 = int_to_ptr.vmem [resolvable:$true] %s99
            %102 = dma.hbm_to_vmem [thread:$0]  %s98, 16, %s100, %s89
          $region20: #{tpu_custom_call.1} parent=15 // pred_fallthru
            _
          %p103 = scmp.ge.s32.totalorder %s80, 10
          // Predicated region
          $region25: #{tpu_custom_call.1} parent=15 // pred_check
            %p104 = pneg %p103
          $region26: #{tpu_custom_call.1} parent=15 // pred_check_branch
            %106 = sbr.rel (%p104) target = $region28
          $region27: #{tpu_custom_call.1} parent=15 // pred_region
            %s107 = sld [smem:[#allocation5 + %s81]]
            %s108 = scalar_lea.hbm %s2, %s107
            %s109 = smul.u32 %s74, 8
            %s110 = scalar_lea.vmem [#allocation2], %s109
            %s111 = scalar_lea.sflag [#allocation3], %s109
            // Predicated region
            $region29: #{tpu_custom_call.1} parent=27 // pred_check
              _
            $region30: #{tpu_custom_call.1} parent=27 // pred_check_branch
              %113 = sbr.rel target = $region32
            $region31: #{tpu_custom_call.1} parent=27 // pred_region
              %114 = sst [smem:[#allocation10]] [#allocation13]
              %115 = sst [smem:[#allocation11]] [#allocation12]
            $region32: #{tpu_custom_call.1} parent=27 // pred_fallthru
              _
            %117 = shalt.err (0)
            %s119 = sshll.u32 %s108, 4
            %s120 = int_to_ptr.hbm [resolvable:$true] %s119
            %s121 = sshll.u32 %s110, 4
            %s122 = int_to_ptr.vmem [resolvable:$true] %s121
            %124 = dma.hbm_to_vmem [thread:$0]  %s120, 16, %s122, %s111
          $region28: #{tpu_custom_call.1} parent=15 // pred_fallthru
            _
          %s125 = sadd.s32 %s80, 1
          %p126 = scmp.lt.s32.totalorder %s125, 10
          // Predicated region
          $region33: #{tpu_custom_call.1} parent=15 // pred_check
            %p127 = pneg %p126
          $region34: #{tpu_custom_call.1} parent=15 // pred_check_branch
            %129 = sbr.rel (%p127) target = $region36
          $region35: #{tpu_custom_call.1} parent=15 // pred_region
            %s130 = scalar_lea.hbm %s1, %s125
            %s131 = smul.u32 %s74, 8
            %s132 = sadd.s32 1, %s131
            %s133 = scalar_lea.vmem [#allocation2], %s132
            %s134 = scalar_lea.sflag [#allocation3], %s132
            // Predicated region
            $region37: #{tpu_custom_call.1} parent=35 // pred_check
              _
            $region38: #{tpu_custom_call.1} parent=35 // pred_check_branch
              %136 = sbr.rel target = $region40
            $region39: #{tpu_custom_call.1} parent=35 // pred_region
              %137 = sst [smem:[#allocation10]] [#allocation15]
              %138 = sst [smem:[#allocation11]] [#allocation14]
            $region40: #{tpu_custom_call.1} parent=35 // pred_fallthru
              _
            %140 = shalt.err (0)
            %s142 = sshll.u32 %s130, 4
            %s143 = int_to_ptr.hbm [resolvable:$true] %s142
            %s144 = sshll.u32 %s133, 4
            %s145 = int_to_ptr.vmem [resolvable:$true] %s144
            %147 = dma.hbm_to_vmem [thread:$0]  %s143, 16, %s145, %s134
          $region36: #{tpu_custom_call.1} parent=15 // pred_fallthru
            _
          %p148 = scmp.ge.s32.totalorder %s125, 10
          // Predicated region
          $region41: #{tpu_custom_call.1} parent=15 // pred_check
            %p149 = pneg %p148
          $region42: #{tpu_custom_call.1} parent=15 // pred_check_branch
            %151 = sbr.rel (%p149) target = $region44
          $region43: #{tpu_custom_call.1} parent=15 // pred_region
            %s152 = sadd.s32 %s81, 1
            %s153 = sld [smem:[#allocation5 + %s152]]
            %s154 = scalar_lea.hbm %s2, %s153
            %s155 = smul.u32 %s74, 8
            %s156 = sadd.s32 1, %s155
            %s157 = scalar_lea.vmem [#allocation2], %s156
            %s158 = scalar_lea.sflag [#allocation3], %s156
            // Predicated region
            $region45: #{tpu_custom_call.1} parent=43 // pred_check
              _
            $region46: #{tpu_custom_call.1} parent=43 // pred_check_branch
              %160 = sbr.rel target = $region48
            $region47: #{tpu_custom_call.1} parent=43 // pred_region
              %161 = sst [smem:[#allocation10]] [#allocation17]
              %162 = sst [smem:[#allocation11]] [#allocation16]
            $region48: #{tpu_custom_call.1} parent=43 // pred_fallthru
              _
            %164 = shalt.err (0)
            %s166 = sshll.u32 %s154, 4
            %s167 = int_to_ptr.hbm [resolvable:$true] %s166
            %s168 = sshll.u32 %s157, 4
            %s169 = int_to_ptr.vmem [resolvable:$true] %s168
            %171 = dma.hbm_to_vmem [thread:$0]  %s167, 16, %s169, %s158
          $region44: #{tpu_custom_call.1} parent=15 // pred_fallthru
            _
          %s172 = sadd.s32 %s80, 2
          %p173 = scmp.lt.s32.totalorder %s172, 10
          // Predicated region
          $region49: #{tpu_custom_call.1} parent=15 // pred_check
            %p174 = pneg %p173
          $region50: #{tpu_custom_call.1} parent=15 // pred_check_branch
            %176 = sbr.rel (%p174) target = $region52
          $region51: #{tpu_custom_call.1} parent=15 // pred_region
            %s177 = scalar_lea.hbm %s1, %s172
            %s178 = smul.u32 %s74, 8
            %s179 = sadd.s32 2, %s178
            %s180 = scalar_lea.vmem [#allocation2], %s179
            %s181 = scalar_lea.sflag [#allocation3], %s179
            // Predicated region
            $region53: #{tpu_custom_call.1} parent=51 // pred_check
              _
            $region54: #{tpu_custom_call.1} parent=51 // pred_check_branch
              %183 = sbr.rel target = $region56
            $region55: #{tpu_custom_call.1} parent=51 // pred_region
              %184 = sst [smem:[#allocation10]] [#allocation19]
              %185 = sst [smem:[#allocation11]] [#allocation18]
            $region56: #{tpu_custom_call.1} parent=51 // pred_fallthru
              _
            %187 = shalt.err (0)
            %s189 = sshll.u32 %s177, 4
            %s190 = int_to_ptr.hbm [resolvable:$true] %s189
            %s191 = sshll.u32 %s180, 4
            %s192 = int_to_ptr.vmem [resolvable:$true] %s191
            %194 = dma.hbm_to_vmem [thread:$0]  %s190, 16, %s192, %s181
          $region52: #{tpu_custom_call.1} parent=15 // pred_fallthru
            _
          %p195 = scmp.ge.s32.totalorder %s172, 10
          // Predicated region
          $region57: #{tpu_custom_call.1} parent=15 // pred_check
            %p196 = pneg %p195
          $region58: #{tpu_custom_call.1} parent=15 // pred_check_branch
            %198 = sbr.rel (%p196) target = $region60
          $region59: #{tpu_custom_call.1} parent=15 // pred_region
            %s199 = sadd.s32 %s81, 2
            %s200 = sld [smem:[#allocation5 + %s199]]
            %s201 = scalar_lea.hbm %s2, %s200
            %s202 = smul.u32 %s74, 8
            %s203 = sadd.s32 2, %s202
            %s204 = scalar_lea.vmem [#allocation2], %s203
            %s205 = scalar_lea.sflag [#allocation3], %s203
            // Predicated region
            $region61: #{tpu_custom_call.1} parent=59 // pred_check
              _
            $region62: #{tpu_custom_call.1} parent=59 // pred_check_branch
              %207 = sbr.rel target = $region64
            $region63: #{tpu_custom_call.1} parent=59 // pred_region
              %208 = sst [smem:[#allocation10]] [#allocation21]
              %209 = sst [smem:[#allocation11]] [#allocation20]
            $region64: #{tpu_custom_call.1} parent=59 // pred_fallthru
              _
            %211 = shalt.err (0)
            %s213 = sshll.u32 %s201, 4
            %s214 = int_to_ptr.hbm [resolvable:$true] %s213
            %s215 = sshll.u32 %s204, 4
            %s216 = int_to_ptr.vmem [resolvable:$true] %s215
            %218 = dma.hbm_to_vmem [thread:$0]  %s214, 16, %s216, %s205
          $region60: #{tpu_custom_call.1} parent=15 // pred_fallthru
            _
          %s219 = sadd.s32 %s80, 3
          %p220 = scmp.lt.s32.totalorder %s219, 10
          // Predicated region
          $region65: #{tpu_custom_call.1} parent=15 // pred_check
            %p221 = pneg %p220
          $region66: #{tpu_custom_call.1} parent=15 // pred_check_branch
            %223 = sbr.rel (%p221) target = $region68
          $region67: #{tpu_custom_call.1} parent=15 // pred_region
            %s224 = scalar_lea.hbm %s1, %s219
            %s225 = smul.u32 %s74, 8
            %s226 = sadd.s32 3, %s225
            %s227 = scalar_lea.vmem [#allocation2], %s226
            %s228 = scalar_lea.sflag [#allocation3], %s226
            // Predicated region
            $region69: #{tpu_custom_call.1} parent=67 // pred_check
              _
            $region70: #{tpu_custom_call.1} parent=67 // pred_check_branch
              %230 = sbr.rel target = $region72
            $region71: #{tpu_custom_call.1} parent=67 // pred_region
              %231 = sst [smem:[#allocation10]] [#allocation23]
              %232 = sst [smem:[#allocation11]] [#allocation22]
            $region72: #{tpu_custom_call.1} parent=67 // pred_fallthru
              _
            %234 = shalt.err (0)
            %s236 = sshll.u32 %s224, 4
            %s237 = int_to_ptr.hbm [resolvable:$true] %s236
            %s238 = sshll.u32 %s227, 4
            %s239 = int_to_ptr.vmem [resolvable:$true] %s238
            %241 = dma.hbm_to_vmem [thread:$0]  %s237, 16, %s239, %s228
          $region68: #{tpu_custom_call.1} parent=15 // pred_fallthru
            _
          %p242 = scmp.ge.s32.totalorder %s219, 10
          // Predicated region
          $region73: #{tpu_custom_call.1} parent=15 // pred_check
            %p243 = pneg %p242
          $region74: #{tpu_custom_call.1} parent=15 // pred_check_branch
            %245 = sbr.rel (%p243) target = $region76
          $region75: #{tpu_custom_call.1} parent=15 // pred_region
            %s246 = sadd.s32 %s81, 3
            %s247 = sld [smem:[#allocation5 + %s246]]
            %s248 = scalar_lea.hbm %s2, %s247
            %s249 = smul.u32 %s74, 8
            %s250 = sadd.s32 3, %s249
            %s251 = scalar_lea.vmem [#allocation2], %s250
            %s252 = scalar_lea.sflag [#allocation3], %s250
            // Predicated region
            $region77: #{tpu_custom_call.1} parent=75 // pred_check
              _
            $region78: #{tpu_custom_call.1} parent=75 // pred_check_branch
              %254 = sbr.rel target = $region80
            $region79: #{tpu_custom_call.1} parent=75 // pred_region
              %255 = sst [smem:[#allocation10]] [#allocation25]
              %256 = sst [smem:[#allocation11]] [#allocation24]
            $region80: #{tpu_custom_call.1} parent=75 // pred_fallthru
              _
            %258 = shalt.err (0)
            %s260 = sshll.u32 %s248, 4
            %s261 = int_to_ptr.hbm [resolvable:$true] %s260
            %s262 = sshll.u32 %s251, 4
            %s263 = int_to_ptr.vmem [resolvable:$true] %s262
            %265 = dma.hbm_to_vmem [thread:$0]  %s261, 16, %s263, %s252
          $region76: #{tpu_custom_call.1} parent=15 // pred_fallthru
            _
          %s266 = sadd.s32 %s80, 4
          %p267 = scmp.lt.s32.totalorder %s266, 10
          // Predicated region
          $region81: #{tpu_custom_call.1} parent=15 // pred_check
            %p268 = pneg %p267
          $region82: #{tpu_custom_call.1} parent=15 // pred_check_branch
            %270 = sbr.rel (%p268) target = $region84
          $region83: #{tpu_custom_call.1} parent=15 // pred_region
            %s271 = scalar_lea.hbm %s1, %s266
            %s272 = smul.u32 %s74, 8
            %s273 = sadd.s32 4, %s272
            %s274 = scalar_lea.vmem [#allocation2], %s273
            %s275 = scalar_lea.sflag [#allocation3], %s273
            // Predicated region
            $region85: #{tpu_custom_call.1} parent=83 // pred_check
              _
            $region86: #{tpu_custom_call.1} parent=83 // pred_check_branch
              %277 = sbr.rel target = $region88
            $region87: #{tpu_custom_call.1} parent=83 // pred_region
              %278 = sst [smem:[#allocation10]] [#allocation27]
              %279 = sst [smem:[#allocation11]] [#allocation26]
            $region88: #{tpu_custom_call.1} parent=83 // pred_fallthru
              _
            %281 = shalt.err (0)
            %s283 = sshll.u32 %s271, 4
            %s284 = int_to_ptr.hbm [resolvable:$true] %s283
            %s285 = sshll.u32 %s274, 4
            %s286 = int_to_ptr.vmem [resolvable:$true] %s285
            %288 = dma.hbm_to_vmem [thread:$0]  %s284, 16, %s286, %s275
          $region84: #{tpu_custom_call.1} parent=15 // pred_fallthru
            _
          %p289 = scmp.ge.s32.totalorder %s266, 10
          // Predicated region
          $region89: #{tpu_custom_call.1} parent=15 // pred_check
            %p290 = pneg %p289
          $region90: #{tpu_custom_call.1} parent=15 // pred_check_branch
            %292 = sbr.rel (%p290) target = $region92
          $region91: #{tpu_custom_call.1} parent=15 // pred_region
            %s293 = sadd.s32 %s81, 4
            %s294 = sld [smem:[#allocation5 + %s293]]
            %s295 = scalar_lea.hbm %s2, %s294
            %s296 = smul.u32 %s74, 8
            %s297 = sadd.s32 4, %s296
            %s298 = scalar_lea.vmem [#allocation2], %s297
            %s299 = scalar_lea.sflag [#allocation3], %s297
            // Predicated region
            $region93: #{tpu_custom_call.1} parent=91 // pred_check
              _
            $region94: #{tpu_custom_call.1} parent=91 // pred_check_branch
              %301 = sbr.rel target = $region96
            $region95: #{tpu_custom_call.1} parent=91 // pred_region
              %302 = sst [smem:[#allocation10]] [#allocation29]
              %303 = sst [smem:[#allocation11]] [#allocation28]
            $region96: #{tpu_custom_call.1} parent=91 // pred_fallthru
              _
            %305 = shalt.err (0)
            %s307 = sshll.u32 %s295, 4
            %s308 = int_to_ptr.hbm [resolvable:$true] %s307
            %s309 = sshll.u32 %s298, 4
            %s310 = int_to_ptr.vmem [resolvable:$true] %s309
            %312 = dma.hbm_to_vmem [thread:$0]  %s308, 16, %s310, %s299
          $region92: #{tpu_custom_call.1} parent=15 // pred_fallthru
            _
          %s313 = sadd.s32 %s80, 5
          %p314 = scmp.lt.s32.totalorder %s313, 10
          // Predicated region
          $region97: #{tpu_custom_call.1} parent=15 // pred_check
            %p315 = pneg %p314
          $region98: #{tpu_custom_call.1} parent=15 // pred_check_branch
            %317 = sbr.rel (%p315) target = $region100
          $region99: #{tpu_custom_call.1} parent=15 // pred_region
            %s318 = scalar_lea.hbm %s1, %s313
            %s319 = smul.u32 %s74, 8
            %s320 = sadd.s32 5, %s319
            %s321 = scalar_lea.vmem [#allocation2], %s320
            %s322 = scalar_lea.sflag [#allocation3], %s320
            // Predicated region
            $region101: #{tpu_custom_call.1} parent=99 // pred_check
              _
            $region102: #{tpu_custom_call.1} parent=99 // pred_check_branch
              %324 = sbr.rel target = $region104
            $region103: #{tpu_custom_call.1} parent=99 // pred_region
              %325 = sst [smem:[#allocation10]] [#allocation31]
              %326 = sst [smem:[#allocation11]] [#allocation30]
            $region104: #{tpu_custom_call.1} parent=99 // pred_fallthru
              _
            %328 = shalt.err (0)
            %s330 = sshll.u32 %s318, 4
            %s331 = int_to_ptr.hbm [resolvable:$true] %s330
            %s332 = sshll.u32 %s321, 4
            %s333 = int_to_ptr.vmem [resolvable:$true] %s332
            %335 = dma.hbm_to_vmem [thread:$0]  %s331, 16, %s333, %s322
          $region100: #{tpu_custom_call.1} parent=15 // pred_fallthru
            _
          %p336 = scmp.ge.s32.totalorder %s313, 10
          // Predicated region
          $region105: #{tpu_custom_call.1} parent=15 // pred_check
            %p337 = pneg %p336
          $region106: #{tpu_custom_call.1} parent=15 // pred_check_branch
            %339 = sbr.rel (%p337) target = $region108
          $region107: #{tpu_custom_call.1} parent=15 // pred_region
            %s340 = sadd.s32 %s81, 5
            %s341 = sld [smem:[#allocation5 + %s340]]
            %s342 = scalar_lea.hbm %s2, %s341
            %s343 = smul.u32 %s74, 8
            %s344 = sadd.s32 5, %s343
            %s345 = scalar_lea.vmem [#allocation2], %s344
            %s346 = scalar_lea.sflag [#allocation3], %s344
            // Predicated region
            $region109: #{tpu_custom_call.1} parent=107 // pred_check
              _
            $region110: #{tpu_custom_call.1} parent=107 // pred_check_branch
              %348 = sbr.rel target = $region112
            $region111: #{tpu_custom_call.1} parent=107 // pred_region
              %349 = sst [smem:[#allocation10]] [#allocation33]
              %350 = sst [smem:[#allocation11]] [#allocation32]
            $region112: #{tpu_custom_call.1} parent=107 // pred_fallthru
              _
            %352 = shalt.err (0)
            %s354 = sshll.u32 %s342, 4
            %s355 = int_to_ptr.hbm [resolvable:$true] %s354
            %s356 = sshll.u32 %s345, 4
            %s357 = int_to_ptr.vmem [resolvable:$true] %s356
            %359 = dma.hbm_to_vmem [thread:$0]  %s355, 16, %s357, %s346
          $region108: #{tpu_custom_call.1} parent=15 // pred_fallthru
            _
          %s360 = sadd.s32 %s80, 6
          %p361 = scmp.lt.s32.totalorder %s360, 10
          // Predicated region
          $region113: #{tpu_custom_call.1} parent=15 // pred_check
            %p362 = pneg %p361
          $region114: #{tpu_custom_call.1} parent=15 // pred_check_branch
            %364 = sbr.rel (%p362) target = $region116
          $region115: #{tpu_custom_call.1} parent=15 // pred_region
            %s365 = scalar_lea.hbm %s1, %s360
            %s366 = smul.u32 %s74, 8
            %s367 = sadd.s32 6, %s366
            %s368 = scalar_lea.vmem [#allocation2], %s367
            %s369 = scalar_lea.sflag [#allocation3], %s367
            // Predicated region
            $region117: #{tpu_custom_call.1} parent=115 // pred_check
              _
            $region118: #{tpu_custom_call.1} parent=115 // pred_check_branch
              %371 = sbr.rel target = $region120
            $region119: #{tpu_custom_call.1} parent=115 // pred_region
              %372 = sst [smem:[#allocation10]] [#allocation35]
              %373 = sst [smem:[#allocation11]] [#allocation34]
            $region120: #{tpu_custom_call.1} parent=115 // pred_fallthru
              _
            %375 = shalt.err (0)
            %s377 = sshll.u32 %s365, 4
            %s378 = int_to_ptr.hbm [resolvable:$true] %s377
            %s379 = sshll.u32 %s368, 4
            %s380 = int_to_ptr.vmem [resolvable:$true] %s379
            %382 = dma.hbm_to_vmem [thread:$0]  %s378, 16, %s380, %s369
          $region116: #{tpu_custom_call.1} parent=15 // pred_fallthru
            _
          %p383 = scmp.ge.s32.totalorder %s360, 10
          // Predicated region
          $region121: #{tpu_custom_call.1} parent=15 // pred_check
            %p384 = pneg %p383
          $region122: #{tpu_custom_call.1} parent=15 // pred_check_branch
            %386 = sbr.rel (%p384) target = $region124
          $region123: #{tpu_custom_call.1} parent=15 // pred_region
            %s387 = sadd.s32 %s81, 6
            %s388 = sld [smem:[#allocation5 + %s387]]
            %s389 = scalar_lea.hbm %s2, %s388
            %s390 = smul.u32 %s74, 8
            %s391 = sadd.s32 6, %s390
            %s392 = scalar_lea.vmem [#allocation2], %s391
            %s393 = scalar_lea.sflag [#allocation3], %s391
            // Predicated region
            $region125: #{tpu_custom_call.1} parent=123 // pred_check
              _
            $region126: #{tpu_custom_call.1} parent=123 // pred_check_branch
              %395 = sbr.rel target = $region128
            $region127: #{tpu_custom_call.1} parent=123 // pred_region
              %396 = sst [smem:[#allocation10]] [#allocation37]
              %397 = sst [smem:[#allocation11]] [#allocation36]
            $region128: #{tpu_custom_call.1} parent=123 // pred_fallthru
              _
            %399 = shalt.err (0)
            %s401 = sshll.u32 %s389, 4
            %s402 = int_to_ptr.hbm [resolvable:$true] %s401
            %s403 = sshll.u32 %s392, 4
            %s404 = int_to_ptr.vmem [resolvable:$true] %s403
            %406 = dma.hbm_to_vmem [thread:$0]  %s402, 16, %s404, %s393
          $region124: #{tpu_custom_call.1} parent=15 // pred_fallthru
            _
          %s407 = sadd.s32 %s80, 7
          %p408 = scmp.lt.s32.totalorder %s407, 10
          // Predicated region
          $region129: #{tpu_custom_call.1} parent=15 // pred_check
            %p409 = pneg %p408
          $region130: #{tpu_custom_call.1} parent=15 // pred_check_branch
            %411 = sbr.rel (%p409) target = $region132
          $region131: #{tpu_custom_call.1} parent=15 // pred_region
            %s412 = scalar_lea.hbm %s1, %s407
            %s413 = smul.u32 %s74, 8
            %s414 = sadd.s32 7, %s413
            %s415 = scalar_lea.vmem [#allocation2], %s414
            %s416 = scalar_lea.sflag [#allocation3], %s414
            // Predicated region
            $region133: #{tpu_custom_call.1} parent=131 // pred_check
              _
            $region134: #{tpu_custom_call.1} parent=131 // pred_check_branch
              %418 = sbr.rel target = $region136
            $region135: #{tpu_custom_call.1} parent=131 // pred_region
              %419 = sst [smem:[#allocation10]] [#allocation39]
              %420 = sst [smem:[#allocation11]] [#allocation38]
            $region136: #{tpu_custom_call.1} parent=131 // pred_fallthru
              _
            %422 = shalt.err (0)
            %s424 = sshll.u32 %s412, 4
            %s425 = int_to_ptr.hbm [resolvable:$true] %s424
            %s426 = sshll.u32 %s415, 4
            %s427 = int_to_ptr.vmem [resolvable:$true] %s426
            %429 = dma.hbm_to_vmem [thread:$0]  %s425, 16, %s427, %s416
          $region132: #{tpu_custom_call.1} parent=15 // pred_fallthru
            _
          %p430 = scmp.ge.s32.totalorder %s407, 10
          // Predicated region
          $region137: #{tpu_custom_call.1} parent=15 // pred_check
            %p431 = pneg %p430
          $region138: #{tpu_custom_call.1} parent=15 // pred_check_branch
            %433 = sbr.rel (%p431) target = $region140
          $region139: #{tpu_custom_call.1} parent=15 // pred_region
            %s434 = sadd.s32 %s81, 7
            %s435 = sld [smem:[#allocation5 + %s434]]
            %s436 = scalar_lea.hbm %s2, %s435
            %s437 = smul.u32 %s74, 8
            %s438 = sadd.s32 7, %s437
            %s439 = scalar_lea.vmem [#allocation2], %s438
            %s440 = scalar_lea.sflag [#allocation3], %s438
            // Predicated region
            $region141: #{tpu_custom_call.1} parent=139 // pred_check
              _
            $region142: #{tpu_custom_call.1} parent=139 // pred_check_branch
              %442 = sbr.rel target = $region144
            $region143: #{tpu_custom_call.1} parent=139 // pred_region
              %443 = sst [smem:[#allocation10]] [#allocation41]
              %444 = sst [smem:[#allocation11]] [#allocation40]
            $region144: #{tpu_custom_call.1} parent=139 // pred_fallthru
              _
            %446 = shalt.err (0)
            %s448 = sshll.u32 %s436, 4
            %s449 = int_to_ptr.hbm [resolvable:$true] %s448
            %s450 = sshll.u32 %s439, 4
            %s451 = int_to_ptr.vmem [resolvable:$true] %s450
            %453 = dma.hbm_to_vmem [thread:$0]  %s449, 16, %s451, %s440
          $region140: #{tpu_custom_call.1} parent=15 // pred_fallthru
            _
        $region16: #{tpu_custom_call.1} parent=11 // pred_fallthru
          _
        %s454 = sadd.s32 %s27, 1
        %p455 = scmp.lt.s32.totalorder %s454, 4
        // Predicated region
        $region145: #{tpu_custom_call.1} parent=11 // pred_check
          %p456 = pneg %p455
        $region146: #{tpu_custom_call.1} parent=11 // pred_check_branch
          %458 = sbr.rel (%p456) target = $region148
        $region147: #{tpu_custom_call.1} parent=11 // pred_region
          %s459 = ssub.s32 1, %s74
          %s460 = smul.u32 %s26, 32
          %s461 = smul.u32 %s454, 8
          %s462 = sadd.s32 %s460, %s461
          %p463 = scmp.lt.s32.totalorder %s461, 10
          // Predicated region
          $region149: #{tpu_custom_call.1} parent=147 // pred_check
            %p464 = pneg %p463
          $region150: #{tpu_custom_call.1} parent=147 // pred_check_branch
            %466 = sbr.rel (%p464) target = $region152
          $region151: #{tpu_custom_call.1} parent=147 // pred_region
            %s467 = scalar_lea.hbm %s1, %s461
            %s468 = smul.u32 %s459, 8
            %s469 = scalar_lea.vmem [#allocation2], %s468
            %s470 = scalar_lea.sflag [#allocation3], %s468
            // Predicated region
            $region153: #{tpu_custom_call.1} parent=151 // pred_check
              _
            $region154: #{tpu_custom_call.1} parent=151 // pred_check_branch
              %472 = sbr.rel target = $region156
            $region155: #{tpu_custom_call.1} parent=151 // pred_region
              %473 = sst [smem:[#allocation10]] [#allocation43]
              %474 = sst [smem:[#allocation11]] [#allocation42]
            $region156: #{tpu_custom_call.1} parent=151 // pred_fallthru
              _
            %476 = shalt.err (0)
            %s478 = sshll.u32 %s467, 4
            %s479 = int_to_ptr.hbm [resolvable:$true] %s478
            %s480 = sshll.u32 %s469, 4
            %s481 = int_to_ptr.vmem [resolvable:$true] %s480
            %483 = dma.hbm_to_vmem [thread:$0]  %s479, 16, %s481, %s470
          $region152: #{tpu_custom_call.1} parent=147 // pred_fallthru
            _
          %p484 = scmp.ge.s32.totalorder %s461, 10
          // Predicated region
          $region157: #{tpu_custom_call.1} parent=147 // pred_check
            %p485 = pneg %p484
          $region158: #{tpu_custom_call.1} parent=147 // pred_check_branch
            %487 = sbr.rel (%p485) target = $region160
          $region159: #{tpu_custom_call.1} parent=147 // pred_region
            %s488 = sld [smem:[#allocation5 + %s462]]
            %s489 = scalar_lea.hbm %s2, %s488
            %s490 = smul.u32 %s459, 8
            %s491 = scalar_lea.vmem [#allocation2], %s490
            %s492 = scalar_lea.sflag [#allocation3], %s490
            // Predicated region
            $region161: #{tpu_custom_call.1} parent=159 // pred_check
              _
            $region162: #{tpu_custom_call.1} parent=159 // pred_check_branch
              %494 = sbr.rel target = $region164
            $region163: #{tpu_custom_call.1} parent=159 // pred_region
              %495 = sst [smem:[#allocation10]] [#allocation45]
              %496 = sst [smem:[#allocation11]] [#allocation44]
            $region164: #{tpu_custom_call.1} parent=159 // pred_fallthru
              _
            %498 = shalt.err (0)
            %s500 = sshll.u32 %s489, 4
            %s501 = int_to_ptr.hbm [resolvable:$true] %s500
            %s502 = sshll.u32 %s491, 4
            %s503 = int_to_ptr.vmem [resolvable:$true] %s502
            %505 = dma.hbm_to_vmem [thread:$0]  %s501, 16, %s503, %s492
          $region160: #{tpu_custom_call.1} parent=147 // pred_fallthru
            _
          %s506 = sadd.s32 %s461, 1
          %p507 = scmp.lt.s32.totalorder %s506, 10
          // Predicated region
          $region165: #{tpu_custom_call.1} parent=147 // pred_check
            %p508 = pneg %p507
          $region166: #{tpu_custom_call.1} parent=147 // pred_check_branch
            %510 = sbr.rel (%p508) target = $region168
          $region167: #{tpu_custom_call.1} parent=147 // pred_region
            %s511 = scalar_lea.hbm %s1, %s506
            %s512 = smul.u32 %s459, 8
            %s513 = sadd.s32 1, %s512
            %s514 = scalar_lea.vmem [#allocation2], %s513
            %s515 = scalar_lea.sflag [#allocation3], %s513
            // Predicated region
            $region169: #{tpu_custom_call.1} parent=167 // pred_check
              _
            $region170: #{tpu_custom_call.1} parent=167 // pred_check_branch
              %517 = sbr.rel target = $region172
            $region171: #{tpu_custom_call.1} parent=167 // pred_region
              %518 = sst [smem:[#allocation10]] [#allocation47]
              %519 = sst [smem:[#allocation11]] [#allocation46]
            $region172: #{tpu_custom_call.1} parent=167 // pred_fallthru
              _
            %521 = shalt.err (0)
            %s523 = sshll.u32 %s511, 4
            %s524 = int_to_ptr.hbm [resolvable:$true] %s523
            %s525 = sshll.u32 %s514, 4
            %s526 = int_to_ptr.vmem [resolvable:$true] %s525
            %528 = dma.hbm_to_vmem [thread:$0]  %s524, 16, %s526, %s515
          $region168: #{tpu_custom_call.1} parent=147 // pred_fallthru
            _
          %p529 = scmp.ge.s32.totalorder %s506, 10
          // Predicated region
          $region173: #{tpu_custom_call.1} parent=147 // pred_check
            %p530 = pneg %p529
          $region174: #{tpu_custom_call.1} parent=147 // pred_check_branch
            %532 = sbr.rel (%p530) target = $region176
          $region175: #{tpu_custom_call.1} parent=147 // pred_region
            %s533 = sadd.s32 %s462, 1
            %s534 = sld [smem:[#allocation5 + %s533]]
            %s535 = scalar_lea.hbm %s2, %s534
            %s536 = smul.u32 %s459, 8
            %s537 = sadd.s32 1, %s536
            %s538 = scalar_lea.vmem [#allocation2], %s537
            %s539 = scalar_lea.sflag [#allocation3], %s537
            // Predicated region
            $region177: #{tpu_custom_call.1} parent=175 // pred_check
              _
            $region178: #{tpu_custom_call.1} parent=175 // pred_check_branch
              %541 = sbr.rel target = $region180
            $region179: #{tpu_custom_call.1} parent=175 // pred_region
              %542 = sst [smem:[#allocation10]] [#allocation49]
              %543 = sst [smem:[#allocation11]] [#allocation48]
            $region180: #{tpu_custom_call.1} parent=175 // pred_fallthru
              _
            %545 = shalt.err (0)
            %s547 = sshll.u32 %s535, 4
            %s548 = int_to_ptr.hbm [resolvable:$true] %s547
            %s549 = sshll.u32 %s538, 4
            %s550 = int_to_ptr.vmem [resolvable:$true] %s549
            %552 = dma.hbm_to_vmem [thread:$0]  %s548, 16, %s550, %s539
          $region176: #{tpu_custom_call.1} parent=147 // pred_fallthru
            _
          %s553 = sadd.s32 %s461, 2
          %p554 = scmp.lt.s32.totalorder %s553, 10
          // Predicated region
          $region181: #{tpu_custom_call.1} parent=147 // pred_check
            %p555 = pneg %p554
          $region182: #{tpu_custom_call.1} parent=147 // pred_check_branch
            %557 = sbr.rel (%p555) target = $region184
          $region183: #{tpu_custom_call.1} parent=147 // pred_region
            %s558 = scalar_lea.hbm %s1, %s553
            %s559 = smul.u32 %s459, 8
            %s560 = sadd.s32 2, %s559
            %s561 = scalar_lea.vmem [#allocation2], %s560
            %s562 = scalar_lea.sflag [#allocation3], %s560
            // Predicated region
            $region185: #{tpu_custom_call.1} parent=183 // pred_check
              _
            $region186: #{tpu_custom_call.1} parent=183 // pred_check_branch
              %564 = sbr.rel target = $region188
            $region187: #{tpu_custom_call.1} parent=183 // pred_region
              %565 = sst [smem:[#allocation10]] [#allocation51]
              %566 = sst [smem:[#allocation11]] [#allocation50]
            $region188: #{tpu_custom_call.1} parent=183 // pred_fallthru
              _
            %568 = shalt.err (0)
            %s570 = sshll.u32 %s558, 4
            %s571 = int_to_ptr.hbm [resolvable:$true] %s570
            %s572 = sshll.u32 %s561, 4
            %s573 = int_to_ptr.vmem [resolvable:$true] %s572
            %575 = dma.hbm_to_vmem [thread:$0]  %s571, 16, %s573, %s562
          $region184: #{tpu_custom_call.1} parent=147 // pred_fallthru
            _
          %p576 = scmp.ge.s32.totalorder %s553, 10
          // Predicated region
          $region189: #{tpu_custom_call.1} parent=147 // pred_check
            %p577 = pneg %p576
          $region190: #{tpu_custom_call.1} parent=147 // pred_check_branch
            %579 = sbr.rel (%p577) target = $region192
          $region191: #{tpu_custom_call.1} parent=147 // pred_region
            %s580 = sadd.s32 %s462, 2
            %s581 = sld [smem:[#allocation5 + %s580]]
            %s582 = scalar_lea.hbm %s2, %s581
            %s583 = smul.u32 %s459, 8
            %s584 = sadd.s32 2, %s583
            %s585 = scalar_lea.vmem [#allocation2], %s584
            %s586 = scalar_lea.sflag [#allocation3], %s584
            // Predicated region
            $region193: #{tpu_custom_call.1} parent=191 // pred_check
              _
            $region194: #{tpu_custom_call.1} parent=191 // pred_check_branch
              %588 = sbr.rel target = $region196
            $region195: #{tpu_custom_call.1} parent=191 // pred_region
              %589 = sst [smem:[#allocation10]] [#allocation53]
              %590 = sst [smem:[#allocation11]] [#allocation52]
            $region196: #{tpu_custom_call.1} parent=191 // pred_fallthru
              _
            %592 = shalt.err (0)
            %s594 = sshll.u32 %s582, 4
            %s595 = int_to_ptr.hbm [resolvable:$true] %s594
            %s596 = sshll.u32 %s585, 4
            %s597 = int_to_ptr.vmem [resolvable:$true] %s596
            %599 = dma.hbm_to_vmem [thread:$0]  %s595, 16, %s597, %s586
          $region192: #{tpu_custom_call.1} parent=147 // pred_fallthru
            _
          %s600 = sadd.s32 %s461, 3
          %p601 = scmp.lt.s32.totalorder %s600, 10
          // Predicated region
          $region197: #{tpu_custom_call.1} parent=147 // pred_check
            %p602 = pneg %p601
          $region198: #{tpu_custom_call.1} parent=147 // pred_check_branch
            %604 = sbr.rel (%p602) target = $region200
          $region199: #{tpu_custom_call.1} parent=147 // pred_region
            %s605 = scalar_lea.hbm %s1, %s600
            %s606 = smul.u32 %s459, 8
            %s607 = sadd.s32 3, %s606
            %s608 = scalar_lea.vmem [#allocation2], %s607
            %s609 = scalar_lea.sflag [#allocation3], %s607
            // Predicated region
            $region201: #{tpu_custom_call.1} parent=199 // pred_check
              _
            $region202: #{tpu_custom_call.1} parent=199 // pred_check_branch
              %611 = sbr.rel target = $region204
            $region203: #{tpu_custom_call.1} parent=199 // pred_region
              %612 = sst [smem:[#allocation10]] [#allocation55]
              %613 = sst [smem:[#allocation11]] [#allocation54]
            $region204: #{tpu_custom_call.1} parent=199 // pred_fallthru
              _
            %615 = shalt.err (0)
            %s617 = sshll.u32 %s605, 4
            %s618 = int_to_ptr.hbm [resolvable:$true] %s617
            %s619 = sshll.u32 %s608, 4
            %s620 = int_to_ptr.vmem [resolvable:$true] %s619
            %622 = dma.hbm_to_vmem [thread:$0]  %s618, 16, %s620, %s609
          $region200: #{tpu_custom_call.1} parent=147 // pred_fallthru
            _
          %p623 = scmp.ge.s32.totalorder %s600, 10
          // Predicated region
          $region205: #{tpu_custom_call.1} parent=147 // pred_check
            %p624 = pneg %p623
          $region206: #{tpu_custom_call.1} parent=147 // pred_check_branch
            %626 = sbr.rel (%p624) target = $region208
          $region207: #{tpu_custom_call.1} parent=147 // pred_region
            %s627 = sadd.s32 %s462, 3
            %s628 = sld [smem:[#allocation5 + %s627]]
            %s629 = scalar_lea.hbm %s2, %s628
            %s630 = smul.u32 %s459, 8
            %s631 = sadd.s32 3, %s630
            %s632 = scalar_lea.vmem [#allocation2], %s631
            %s633 = scalar_lea.sflag [#allocation3], %s631
            // Predicated region
            $region209: #{tpu_custom_call.1} parent=207 // pred_check
              _
            $region210: #{tpu_custom_call.1} parent=207 // pred_check_branch
              %635 = sbr.rel target = $region212
            $region211: #{tpu_custom_call.1} parent=207 // pred_region
              %636 = sst [smem:[#allocation10]] [#allocation57]
              %637 = sst [smem:[#allocation11]] [#allocation56]
            $region212: #{tpu_custom_call.1} parent=207 // pred_fallthru
              _
            %639 = shalt.err (0)
            %s641 = sshll.u32 %s629, 4
            %s642 = int_to_ptr.hbm [resolvable:$true] %s641
            %s643 = sshll.u32 %s632, 4
            %s644 = int_to_ptr.vmem [resolvable:$true] %s643
            %646 = dma.hbm_to_vmem [thread:$0]  %s642, 16, %s644, %s633
          $region208: #{tpu_custom_call.1} parent=147 // pred_fallthru
            _
          %s647 = sadd.s32 %s461, 4
          %p648 = scmp.lt.s32.totalorder %s647, 10
          // Predicated region
          $region213: #{tpu_custom_call.1} parent=147 // pred_check
            %p649 = pneg %p648
          $region214: #{tpu_custom_call.1} parent=147 // pred_check_branch
            %651 = sbr.rel (%p649) target = $region216
          $region215: #{tpu_custom_call.1} parent=147 // pred_region
            %s652 = scalar_lea.hbm %s1, %s647
            %s653 = smul.u32 %s459, 8
            %s654 = sadd.s32 4, %s653
            %s655 = scalar_lea.vmem [#allocation2], %s654
            %s656 = scalar_lea.sflag [#allocation3], %s654
            // Predicated region
            $region217: #{tpu_custom_call.1} parent=215 // pred_check
              _
            $region218: #{tpu_custom_call.1} parent=215 // pred_check_branch
              %658 = sbr.rel target = $region220
            $region219: #{tpu_custom_call.1} parent=215 // pred_region
              %659 = sst [smem:[#allocation10]] [#allocation59]
              %660 = sst [smem:[#allocation11]] [#allocation58]
            $region220: #{tpu_custom_call.1} parent=215 // pred_fallthru
              _
            %662 = shalt.err (0)
            %s664 = sshll.u32 %s652, 4
            %s665 = int_to_ptr.hbm [resolvable:$true] %s664
            %s666 = sshll.u32 %s655, 4
            %s667 = int_to_ptr.vmem [resolvable:$true] %s666
            %669 = dma.hbm_to_vmem [thread:$0]  %s665, 16, %s667, %s656
          $region216: #{tpu_custom_call.1} parent=147 // pred_fallthru
            _
          %p670 = scmp.ge.s32.totalorder %s647, 10
          // Predicated region
          $region221: #{tpu_custom_call.1} parent=147 // pred_check
            %p671 = pneg %p670
          $region222: #{tpu_custom_call.1} parent=147 // pred_check_branch
            %673 = sbr.rel (%p671) target = $region224
          $region223: #{tpu_custom_call.1} parent=147 // pred_region
            %s674 = sadd.s32 %s462, 4
            %s675 = sld [smem:[#allocation5 + %s674]]
            %s676 = scalar_lea.hbm %s2, %s675
            %s677 = smul.u32 %s459, 8
            %s678 = sadd.s32 4, %s677
            %s679 = scalar_lea.vmem [#allocation2], %s678
            %s680 = scalar_lea.sflag [#allocation3], %s678
            // Predicated region
            $region225: #{tpu_custom_call.1} parent=223 // pred_check
              _
            $region226: #{tpu_custom_call.1} parent=223 // pred_check_branch
              %682 = sbr.rel target = $region228
            $region227: #{tpu_custom_call.1} parent=223 // pred_region
              %683 = sst [smem:[#allocation10]] [#allocation61]
              %684 = sst [smem:[#allocation11]] [#allocation60]
            $region228: #{tpu_custom_call.1} parent=223 // pred_fallthru
              _
            %686 = shalt.err (0)
            %s688 = sshll.u32 %s676, 4
            %s689 = int_to_ptr.hbm [resolvable:$true] %s688
            %s690 = sshll.u32 %s679, 4
            %s691 = int_to_ptr.vmem [resolvable:$true] %s690
            %693 = dma.hbm_to_vmem [thread:$0]  %s689, 16, %s691, %s680
          $region224: #{tpu_custom_call.1} parent=147 // pred_fallthru
            _
          %s694 = sadd.s32 %s461, 5
          %p695 = scmp.lt.s32.totalorder %s694, 10
          // Predicated region
          $region229: #{tpu_custom_call.1} parent=147 // pred_check
            %p696 = pneg %p695
          $region230: #{tpu_custom_call.1} parent=147 // pred_check_branch
            %698 = sbr.rel (%p696) target = $region232
          $region231: #{tpu_custom_call.1} parent=147 // pred_region
            %s699 = scalar_lea.hbm %s1, %s694
            %s700 = smul.u32 %s459, 8
            %s701 = sadd.s32 5, %s700
            %s702 = scalar_lea.vmem [#allocation2], %s701
            %s703 = scalar_lea.sflag [#allocation3], %s701
            // Predicated region
            $region233: #{tpu_custom_call.1} parent=231 // pred_check
              _
            $region234: #{tpu_custom_call.1} parent=231 // pred_check_branch
              %705 = sbr.rel target = $region236
            $region235: #{tpu_custom_call.1} parent=231 // pred_region
              %706 = sst [smem:[#allocation10]] [#allocation63]
              %707 = sst [smem:[#allocation11]] [#allocation62]
            $region236: #{tpu_custom_call.1} parent=231 // pred_fallthru
              _
            %709 = shalt.err (0)
            %s711 = sshll.u32 %s699, 4
            %s712 = int_to_ptr.hbm [resolvable:$true] %s711
            %s713 = sshll.u32 %s702, 4
            %s714 = int_to_ptr.vmem [resolvable:$true] %s713
            %716 = dma.hbm_to_vmem [thread:$0]  %s712, 16, %s714, %s703
          $region232: #{tpu_custom_call.1} parent=147 // pred_fallthru
            _
          %p717 = scmp.ge.s32.totalorder %s694, 10
          // Predicated region
          $region237: #{tpu_custom_call.1} parent=147 // pred_check
            %p718 = pneg %p717
          $region238: #{tpu_custom_call.1} parent=147 // pred_check_branch
            %720 = sbr.rel (%p718) target = $region240
          $region239: #{tpu_custom_call.1} parent=147 // pred_region
            %s721 = sadd.s32 %s462, 5
            %s722 = sld [smem:[#allocation5 + %s721]]
            %s723 = scalar_lea.hbm %s2, %s722
            %s724 = smul.u32 %s459, 8
            %s725 = sadd.s32 5, %s724
            %s726 = scalar_lea.vmem [#allocation2], %s725
            %s727 = scalar_lea.sflag [#allocation3], %s725
            // Predicated region
            $region241: #{tpu_custom_call.1} parent=239 // pred_check
              _
            $region242: #{tpu_custom_call.1} parent=239 // pred_check_branch
              %729 = sbr.rel target = $region244
            $region243: #{tpu_custom_call.1} parent=239 // pred_region
              %730 = sst [smem:[#allocation10]] [#allocation65]
              %731 = sst [smem:[#allocation11]] [#allocation64]
            $region244: #{tpu_custom_call.1} parent=239 // pred_fallthru
              _
            %733 = shalt.err (0)
            %s735 = sshll.u32 %s723, 4
            %s736 = int_to_ptr.hbm [resolvable:$true] %s735
            %s737 = sshll.u32 %s726, 4
            %s738 = int_to_ptr.vmem [resolvable:$true] %s737
            %740 = dma.hbm_to_vmem [thread:$0]  %s736, 16, %s738, %s727
          $region240: #{tpu_custom_call.1} parent=147 // pred_fallthru
            _
          %s741 = sadd.s32 %s461, 6
          %p742 = scmp.lt.s32.totalorder %s741, 10
          // Predicated region
          $region245: #{tpu_custom_call.1} parent=147 // pred_check
            %p743 = pneg %p742
          $region246: #{tpu_custom_call.1} parent=147 // pred_check_branch
            %745 = sbr.rel (%p743) target = $region248
          $region247: #{tpu_custom_call.1} parent=147 // pred_region
            %s746 = scalar_lea.hbm %s1, %s741
            %s747 = smul.u32 %s459, 8
            %s748 = sadd.s32 6, %s747
            %s749 = scalar_lea.vmem [#allocation2], %s748
            %s750 = scalar_lea.sflag [#allocation3], %s748
            // Predicated region
            $region249: #{tpu_custom_call.1} parent=247 // pred_check
              _
            $region250: #{tpu_custom_call.1} parent=247 // pred_check_branch
              %752 = sbr.rel target = $region252
            $region251: #{tpu_custom_call.1} parent=247 // pred_region
              %753 = sst [smem:[#allocation10]] [#allocation67]
              %754 = sst [smem:[#allocation11]] [#allocation66]
            $region252: #{tpu_custom_call.1} parent=247 // pred_fallthru
              _
            %756 = shalt.err (0)
            %s758 = sshll.u32 %s746, 4
            %s759 = int_to_ptr.hbm [resolvable:$true] %s758
            %s760 = sshll.u32 %s749, 4
            %s761 = int_to_ptr.vmem [resolvable:$true] %s760
            %763 = dma.hbm_to_vmem [thread:$0]  %s759, 16, %s761, %s750
          $region248: #{tpu_custom_call.1} parent=147 // pred_fallthru
            _
          %p764 = scmp.ge.s32.totalorder %s741, 10
          // Predicated region
          $region253: #{tpu_custom_call.1} parent=147 // pred_check
            %p765 = pneg %p764
          $region254: #{tpu_custom_call.1} parent=147 // pred_check_branch
            %767 = sbr.rel (%p765) target = $region256
          $region255: #{tpu_custom_call.1} parent=147 // pred_region
            %s768 = sadd.s32 %s462, 6
            %s769 = sld [smem:[#allocation5 + %s768]]
            %s770 = scalar_lea.hbm %s2, %s769
            %s771 = smul.u32 %s459, 8
            %s772 = sadd.s32 6, %s771
            %s773 = scalar_lea.vmem [#allocation2], %s772
            %s774 = scalar_lea.sflag [#allocation3], %s772
            // Predicated region
            $region257: #{tpu_custom_call.1} parent=255 // pred_check
              _
            $region258: #{tpu_custom_call.1} parent=255 // pred_check_branch
              %776 = sbr.rel target = $region260
            $region259: #{tpu_custom_call.1} parent=255 // pred_region
              %777 = sst [smem:[#allocation10]] [#allocation69]
              %778 = sst [smem:[#allocation11]] [#allocation68]
            $region260: #{tpu_custom_call.1} parent=255 // pred_fallthru
              _
            %780 = shalt.err (0)
            %s782 = sshll.u32 %s770, 4
            %s783 = int_to_ptr.hbm [resolvable:$true] %s782
            %s784 = sshll.u32 %s773, 4
            %s785 = int_to_ptr.vmem [resolvable:$true] %s784
            %787 = dma.hbm_to_vmem [thread:$0]  %s783, 16, %s785, %s774
          $region256: #{tpu_custom_call.1} parent=147 // pred_fallthru
            _
          %s788 = sadd.s32 %s461, 7
          %p789 = scmp.lt.s32.totalorder %s788, 10
          // Predicated region
          $region261: #{tpu_custom_call.1} parent=147 // pred_check
            %p790 = pneg %p789
          $region262: #{tpu_custom_call.1} parent=147 // pred_check_branch
            %792 = sbr.rel (%p790) target = $region264
          $region263: #{tpu_custom_call.1} parent=147 // pred_region
            %s793 = scalar_lea.hbm %s1, %s788
            %s794 = smul.u32 %s459, 8
            %s795 = sadd.s32 7, %s794
            %s796 = scalar_lea.vmem [#allocation2], %s795
            %s797 = scalar_lea.sflag [#allocation3], %s795
            // Predicated region
            $region265: #{tpu_custom_call.1} parent=263 // pred_check
              _
            $region266: #{tpu_custom_call.1} parent=263 // pred_check_branch
              %799 = sbr.rel target = $region268
            $region267: #{tpu_custom_call.1} parent=263 // pred_region
              %800 = sst [smem:[#allocation10]] [#allocation71]
              %801 = sst [smem:[#allocation11]] [#allocation70]
            $region268: #{tpu_custom_call.1} parent=263 // pred_fallthru
              _
            %803 = shalt.err (0)
            %s805 = sshll.u32 %s793, 4
            %s806 = int_to_ptr.hbm [resolvable:$true] %s805
            %s807 = sshll.u32 %s796, 4
            %s808 = int_to_ptr.vmem [resolvable:$true] %s807
            %810 = dma.hbm_to_vmem [thread:$0]  %s806, 16, %s808, %s797
          $region264: #{tpu_custom_call.1} parent=147 // pred_fallthru
            _
          %p811 = scmp.ge.s32.totalorder %s788, 10
          // Predicated region
          $region269: #{tpu_custom_call.1} parent=147 // pred_check
            %p812 = pneg %p811
          $region270: #{tpu_custom_call.1} parent=147 // pred_check_branch
            %814 = sbr.rel (%p812) target = $region272
          $region271: #{tpu_custom_call.1} parent=147 // pred_region
            %s815 = sadd.s32 %s462, 7
            %s816 = sld [smem:[#allocation5 + %s815]]
            %s817 = scalar_lea.hbm %s2, %s816
            %s818 = smul.u32 %s459, 8
            %s819 = sadd.s32 7, %s818
            %s820 = scalar_lea.vmem [#allocation2], %s819
            %s821 = scalar_lea.sflag [#allocation3], %s819
            // Predicated region
            $region273: #{tpu_custom_call.1} parent=271 // pred_check
              _
            $region274: #{tpu_custom_call.1} parent=271 // pred_check_branch
              %823 = sbr.rel target = $region276
            $region275: #{tpu_custom_call.1} parent=271 // pred_region
              %824 = sst [smem:[#allocation10]] [#allocation73]
              %825 = sst [smem:[#allocation11]] [#allocation72]
            $region276: #{tpu_custom_call.1} parent=271 // pred_fallthru
              _
            %827 = shalt.err (0)
            %s829 = sshll.u32 %s817, 4
            %s830 = int_to_ptr.hbm [resolvable:$true] %s829
            %s831 = sshll.u32 %s820, 4
            %s832 = int_to_ptr.vmem [resolvable:$true] %s831
            %834 = dma.hbm_to_vmem [thread:$0]  %s830, 16, %s832, %s821
          $region272: #{tpu_custom_call.1} parent=147 // pred_fallthru
            _
        $region148: #{tpu_custom_call.1} parent=11 // pred_fallthru
          _
        %s835 = smul.u32 %s74, 8
        %s836 = scalar_lea.sflag [#allocation3], %s835
        %s837 = smul.u32 1, 1
        %s838 = sshll.u32 %s837, 4
        %839 = dma.done %s836, %s838
        %s840 = sadd.s32 1, %s835
        %s841 = scalar_lea.sflag [#allocation3], %s840
        %s842 = sshll.u32 %s837, 4
        %843 = dma.done %s841, %s842
        %s844 = sadd.s32 2, %s835
        %s845 = scalar_lea.sflag [#allocation3], %s844
        %s846 = sshll.u32 %s837, 4
        %847 = dma.done %s845, %s846
        %s848 = sadd.s32 3, %s835
        %s849 = scalar_lea.sflag [#allocation3], %s848
        %s850 = sshll.u32 %s837, 4
        %851 = dma.done %s849, %s850
        %s852 = sadd.s32 4, %s835
        %s853 = scalar_lea.sflag [#allocation3], %s852
        %s854 = sshll.u32 %s837, 4
        %855 = dma.done %s853, %s854
        %s856 = sadd.s32 5, %s835
        %s857 = scalar_lea.sflag [#allocation3], %s856
        %s858 = sshll.u32 %s837, 4
        %859 = dma.done %s857, %s858
        %s860 = sadd.s32 6, %s835
        %s861 = scalar_lea.sflag [#allocation3], %s860
        %s862 = sshll.u32 %s837, 4
        %863 = dma.done %s861, %s862
        %s864 = sadd.s32 7, %s835
        %s865 = scalar_lea.sflag [#allocation3], %s864
        %s866 = sshll.u32 %s837, 4
        %867 = dma.done %s865, %s866
        %s868 = scalar_lea.vmem [#allocation2], %s835
        %v869 = vld [vmem:[%s868] sm:$0xff]
        %870 = vst [vmem:[%s68] sm:$0xff] %v869
        %s871 = sand.u32 %s41, 1
        %s872 = scalar_lea.sflag [#allocation7], %s871
        %s873 = sand.u32 %s41, 1
        %s874 = smul.addr %s873, 8
        %s875 = scalar_lea.vmem [#allocation6], %s874
        // Predicated region
        $region277: #{tpu_custom_call.1} parent=11 // pred_check
          %p876 = pneg %p47
        $region278: #{tpu_custom_call.1} parent=11 // pred_check_branch
          %878 = sbr.rel (%p876) target = $region280
        $region279: #{tpu_custom_call.1} parent=11 // pred_region
          %880 = vsyncadd %s872, 0
          %s881 = smul.addr %s26, 4
          %s882 = sadd.s32 %s27, %s881
          %s883 = smul.addr %s882, 8
          %s884 = scalar_lea.hbm %s3, %s883
          %s886 = sshll.u32 %s875, 4
          %s887 = int_to_ptr.vmem [resolvable:$true] %s886
          %s888 = sshll.u32 %s884, 4
          %s889 = int_to_ptr.hbm [resolvable:$true] %s888
          %891 = dma.vmem_to_hbm [thread:$0]  %s887, 128, %s889, %s872
        $region280: #{tpu_custom_call.1} parent=11 // pred_fallthru
          _
      $region12: #{tpu_custom_call.1} parent=5 // pred_fallthru
        _
      %p892 = scmp.le.s32.totalorder 1, %s20
      // Predicated region
      $region281: #{tpu_custom_call.1} parent=5 // pred_check
        %p893 = pneg %p892
      $region282: #{tpu_custom_call.1} parent=5 // pred_check_branch
        %895 = sbr.rel (%p893) target = $region284
      $region283: #{tpu_custom_call.1} parent=5 // pred_region
        %s896 = ssub.s32 %s20, 1
        // Predicated region
        $region285: #{tpu_custom_call.1} parent=283 // pred_check
          %p897 = pneg %p53
        $region286: #{tpu_custom_call.1} parent=283 // pred_check_branch
          %899 = sbr.rel (%p897) target = $region288
        $region287: #{tpu_custom_call.1} parent=283 // pred_region
          %s900 = sand.u32 %s44, 1
          %s901 = scalar_lea.sflag [#allocation7], %s900
          %s902 = sand.u32 %s44, 1
          %s903 = smul.addr %s902, 8
          %s904 = scalar_lea.vmem [#allocation6], %s903
          %906 = dma.done %s901, 128
        $region288: #{tpu_custom_call.1} parent=283 // pred_fallthru
          _
      $region284: #{tpu_custom_call.1} parent=5 // pred_fallthru
        _
    $region6: #{tpu_custom_call.1} parent=1 // loop_footer
      %s24 = sadd.s32 1, %s20
    $region7: #{tpu_custom_call.1} parent=1 // loop_footer_branch
      %19 = sbr.rel target = $region3
    $region8: #{tpu_custom_call.1} parent=1 // loop_exit
      _
    %907 = vsyncpa [#allocation7], 1
    %s908 = scalar_lea.sflag [#allocation7], 1
    %909 = vsyncpa %s908, 1
  %910 = vsyncmov [#allocation3]
  %s911 = vpop.sfrf %910
  %p912 = scmp.eq.s32.totalorder %s911, 0
  %p913 = pneg %p912
  %915 = shalt.err (%p913)
  %s916 = scalar_lea.sflag [#allocation3], 1
  %917 = vsyncmov %s916
  %s918 = vpop.sfrf %917
  %p919 = scmp.eq.s32.totalorder %s918, 0
  %p920 = pneg %p919
  %922 = shalt.err (%p920)
  %s923 = scalar_lea.sflag [#allocation3], 2
  %924 = vsyncmov %s923
  %s925 = vpop.sfrf %924
  %p926 = scmp.eq.s32.totalorder %s925, 0
  %p927 = pneg %p926
  %929 = shalt.err (%p927)
  %s930 = scalar_lea.sflag [#allocation3], 3
  %931 = vsyncmov %s930
  %s932 = vpop.sfrf %931
  %p933 = scmp.eq.s32.totalorder %s932, 0
  %p934 = pneg %p933
  %936 = shalt.err (%p934)
  %s937 = scalar_lea.sflag [#allocation3], 4
  %938 = vsyncmov %s937
  %s939 = vpop.sfrf %938
  %p940 = scmp.eq.s32.totalorder %s939, 0
  %p941 = pneg %p940
  %943 = shalt.err (%p941)
  %s944 = scalar_lea.sflag [#allocation3], 5
  %945 = vsyncmov %s944
  %s946 = vpop.sfrf %945
  %p947 = scmp.eq.s32.totalorder %s946, 0
  %p948 = pneg %p947
  %950 = shalt.err (%p948)
  %s951 = scalar_lea.sflag [#allocation3], 6
  %952 = vsyncmov %s951
  %s953 = vpop.sfrf %952
  %p954 = scmp.eq.s32.totalorder %s953, 0
  %p955 = pneg %p954
  %957 = shalt.err (%p955)
  %s958 = scalar_lea.sflag [#allocation3], 7
  %959 = vsyncmov %s958
  %s960 = vpop.sfrf %959
  %p961 = scmp.eq.s32.totalorder %s960, 0
  %p962 = pneg %p961
  %964 = shalt.err (%p962)
  %s965 = scalar_lea.sflag [#allocation3], 8
  %966 = vsyncmov %s965
  %s967 = vpop.sfrf %966
  %p968 = scmp.eq.s32.totalorder %s967, 0
  %p969 = pneg %p968
  %971 = shalt.err (%p969)
  %s972 = scalar_lea.sflag [#allocation3], 9
  %973 = vsyncmov %s972
  %s974 = vpop.sfrf %973
  %p975 = scmp.eq.s32.totalorder %s974, 0
  %p976 = pneg %p975
  %978 = shalt.err (%p976)
  %s979 = scalar_lea.sflag [#allocation3], 10
  %980 = vsyncmov %s979
  %s981 = vpop.sfrf %980
  %p982 = scmp.eq.s32.totalorder %s981, 0
  %p983 = pneg %p982
  %985 = shalt.err (%p983)
  %s986 = scalar_lea.sflag [#allocation3], 11
  %987 = vsyncmov %s986
  %s988 = vpop.sfrf %987
  %p989 = scmp.eq.s32.totalorder %s988, 0
  %p990 = pneg %p989
  %992 = shalt.err (%p990)
  %s993 = scalar_lea.sflag [#allocation3], 12
  %994 = vsyncmov %s993
  %s995 = vpop.sfrf %994
  %p996 = scmp.eq.s32.totalorder %s995, 0
  %p997 = pneg %p996
  %999 = shalt.err (%p997)
  %s1000 = scalar_lea.sflag [#allocation3], 13
  %1001 = vsyncmov %s1000
  %s1002 = vpop.sfrf %1001
  %p1003 = scmp.eq.s32.totalorder %s1002, 0
  %p1004 = pneg %p1003
  %1006 = shalt.err (%p1004)
  %s1007 = scalar_lea.sflag [#allocation3], 14
  %1008 = vsyncmov %s1007
  %s1009 = vpop.sfrf %1008
  %p1010 = scmp.eq.s32.totalorder %s1009, 0
  %p1011 = pneg %p1010
  %1013 = shalt.err (%p1011)
  %s1014 = scalar_lea.sflag [#allocation3], 15
  %1015 = vsyncmov %s1014
  %s1016 = vpop.sfrf %1015
  %p1017 = scmp.eq.s32.totalorder %s1016, 0
  %p1018 = pneg %p1017
  %1020 = shalt.err (%p1018)

</llo_original>
